<compile_context>
chip_gen: v7x
topology: tpu7x:2x2x1
jax: 0.10.0
libtpu: 0.0.40
codegen_flags: <defaults>
</compile_context>

<pallas_src>
import functools

import jax
import jax.numpy as jnp
from jax.experimental import pallas as pl
from jax.experimental.pallas import tpu as pltpu


def _round_up(x, m):
    return ((x + m - 1) // m) * m


def _prior_disc_kernel(x_ref,
                       w0_ref, b0_ref,
                       w1_ref, b1_ref,
                       w2_ref, b2_ref,
                       o_ref):
    """Fused MLP for one row tile: sigmoid(relu(relu(xW0+b0)W1+b1)W2+b2)."""
    h = x_ref[...]                                               # (tile_m, c_in_p) f32
    h = jnp.dot(h.astype(jnp.bfloat16), w0_ref[...],
                preferred_element_type=jnp.float32) + b0_ref[...]
    h = jnp.maximum(h, 0.0)
    h = jnp.dot(h.astype(jnp.bfloat16), w1_ref[...],
                preferred_element_type=jnp.float32) + b1_ref[...]
    h = jnp.maximum(h, 0.0)
    h = jnp.dot(h.astype(jnp.bfloat16), w2_ref[...],
                preferred_element_type=jnp.float32) + b2_ref[...]
    o_ref[...] = 1.0 / (1.0 + jnp.exp(-h))                       # sigmoid (EUP exp)


def prior_discriminator_pallas(x, params, *, tile_m=512):
    """x: (..., in_channel) float32.  Returns sigmoid(MLP(x)) of shape (..., 1)."""
    lead_shape = x.shape[:-1]
    c_in = x.shape[-1]
    x_mat = x.reshape(-1, c_in).astype(jnp.float32)
    m_total = x_mat.shape[0]

    (w0, b0), (w1, b1), (w2, b2) = params
    d0, d1, d2 = w0.shape[1], w1.shape[1], w2.shape[1]           # 1000, 200, 1
    cp = _round_up(c_in, 128)
    d0p, d1p, d2p = _round_up(d0, 128), _round_up(d1, 128), _round_up(d2, 128)

    # Zero-pad all feature dims to lane multiples (exact; see header).
    x_mat = jnp.pad(x_mat, ((0, 0), (0, cp - c_in)))
    w0p = jnp.pad(w0, ((0, cp - c_in), (0, d0p - d0))).astype(jnp.bfloat16)
    b0p = jnp.pad(b0, ((0, 0), (0, d0p - d0))).astype(jnp.float32)
    w1p = jnp.pad(w1, ((0, d0p - d0), (0, d1p - d1))).astype(jnp.bfloat16)
    b1p = jnp.pad(b1, ((0, 0), (0, d1p - d1))).astype(jnp.float32)
    w2p = jnp.pad(w2, ((0, d1p - d1), (0, d2p - d2))).astype(jnp.bfloat16)
    b2p = jnp.pad(b2, ((0, 0), (0, d2p - d2))).astype(jnp.float32)

    # Row tiling: multiple of 8, no larger than the (padded) problem size.
    tile_m = _round_up(max(8, min(tile_m, _round_up(m_total, 8))), 8)
    m_pad = _round_up(m_total, tile_m)
    if m_pad != m_total:
        x_mat = jnp.pad(x_mat, ((0, m_pad - m_total), (0, 0)))

    grid = (m_pad // tile_m,)

    def _resident_spec(arr):
        # Whole (small) array resident in VMEM at every grid step.
        return pl.BlockSpec(arr.shape, lambda i: (0,) * arr.ndim)

    out = pl.pallas_call(
        _prior_disc_kernel,
        out_shape=jax.ShapeDtypeStruct((m_pad, d2p), jnp.float32),
        grid_spec=pltpu.PrefetchScalarGridSpec(
            num_scalar_prefetch=0,
            grid=grid,
            in_specs=[
                pl.BlockSpec((tile_m, cp), lambda i: (i, 0)),
                _resident_spec(w0p), _resident_spec(b0p),
                _resident_spec(w1p), _resident_spec(b1p),
                _resident_spec(w2p), _resident_spec(b2p),
            ],
            out_specs=pl.BlockSpec((tile_m, d2p), lambda i: (i, 0)),
        ),
        compiler_params=pltpu.CompilerParams(
            dimension_semantics=("parallel",)),
    )(x_mat, w0p, b0p, w1p, b1p, w2p, b2p)

    out = out[:m_total, :d2]                 # drop row padding + padded lanes
    return out.reshape(lead_shape + (d2,))


def init_prior_discriminator_params(in_channel, key, gain=0.02):
    """Mimics init_weights(net, 'normal'): W ~ N(0, 0.02), b = 0.
    Weights stored as (d_in, d_out) so the kernel computes x @ W + b,
    equivalent to PyTorch nn.Linear with weight of shape (d_out, d_in)."""
    dims = [in_channel, 1000, 200, 1]
    params = []
    for idx, (din, dout) in enumerate(zip(dims[:-1], dims[1:])):
        k = jax.random.fold_in(key, idx)
        w = gain * jax.random.normal(k, (din, dout), dtype=jnp.float32)
        b = jnp.zeros((1, dout), dtype=jnp.float32)
        params.append((w, b))
    return params


def _reference_forward(x, params):
    """Plain-JAX f32 reference for sanity checking."""
    (w0, b0), (w1, b1), (w2, b2) = params
    h = jnp.maximum(x @ w0 + b0, 0.0)
    h = jnp.maximum(h @ w1 + b1, 0.0)
    return jax.nn.sigmoid(h @ w2 + b2)


if __name__ == "__main__":
    key = jax.random.PRNGKey(0)
    in_channel = 32
    batch = 2

    x = jax.random.normal(
        jax.random.fold_in(key, 100), (batch, in_channel), dtype=jnp.float32)
    params = init_prior_discriminator_params(in_channel, key)

    fwd = jax.jit(functools.partial(prior_discriminator_pallas, tile_m=512))
    y = fwd(x, params)
    jax.block_until_ready(y)

    y_ref = _reference_forward(x, params)
    assert y.shape == (batch, 1), y.shape
    # bf16 MXU inputs (f32 accumulation) => loosened tolerance vs f32 reference.
    assert jnp.allclose(y, y_ref, atol=2e-2, rtol=0.0), (
        "mismatch vs reference", float(jnp.max(jnp.abs(y - y_ref))))

    print("KERNEL_OK")
</pallas_src>

<mosaic_0001>
module attributes {stable_mosaic.version = 11 : i64} {
  func.func @_prior_disc_kernel(%arg0: i32, %arg1: memref<8x128xf32, #tpu.memory_space<vmem>>, %arg2: memref<128x1024xbf16, #tpu.memory_space<vmem>>, %arg3: memref<1x1024xf32, #tpu.memory_space<vmem>>, %arg4: memref<1024x256xbf16, #tpu.memory_space<vmem>>, %arg5: memref<1x256xf32, #tpu.memory_space<vmem>>, %arg6: memref<256x128xbf16, #tpu.memory_space<vmem>>, %arg7: memref<1x128xf32, #tpu.memory_space<vmem>>, %arg8: memref<8x128xf32, #tpu.memory_space<vmem>>) attributes {dimension_semantics = [#tpu.dimension_semantics<parallel>], iteration_bounds = array<i64: 1>, scalar_prefetch = 0 : i64, scratch_operands = 0 : i64, tpu.core_type = #tpu.core_type<tc>, window_params = [{transform_indices = @transform_0, window_bounds = array<i64: 8, 128>}, {pipeline_mode = #tpu.pipeline_mode<synchronous>, transform_indices = @transform_1, window_bounds = array<i64: 128, 1024>}, {pipeline_mode = #tpu.pipeline_mode<synchronous>, transform_indices = @transform_2, window_bounds = array<i64: 1, 1024>}, {pipeline_mode = #tpu.pipeline_mode<synchronous>, transform_indices = @transform_3, window_bounds = array<i64: 1024, 256>}, {pipeline_mode = #tpu.pipeline_mode<synchronous>, transform_indices = @transform_4, window_bounds = array<i64: 1, 256>}, {pipeline_mode = #tpu.pipeline_mode<synchronous>, transform_indices = @transform_5, window_bounds = array<i64: 256, 128>}, {pipeline_mode = #tpu.pipeline_mode<synchronous>, transform_indices = @transform_6, window_bounds = array<i64: 1, 128>}, {transform_indices = @transform_7, window_bounds = array<i64: 8, 128>}]} {
    %c0 = arith.constant 0 : index
    %c0_0 = arith.constant 0 : index
    %0 = vector.load %arg1[%c0, %c0_0] : memref<8x128xf32, #tpu.memory_space<vmem>>, vector<8x128xf32>
    %1 = arith.truncf %0 : vector<8x128xf32> to vector<8x128xbf16>
    %c0_1 = arith.constant 0 : index
    %c0_2 = arith.constant 0 : index
    %2 = vector.load %arg2[%c0_1, %c0_2] : memref<128x1024xbf16, #tpu.memory_space<vmem>>, vector<128x1024xbf16>
    %cst = arith.constant dense<0.000000e+00> : vector<8x1024xf32>
    %3 = tpu.matmul %1, %2, %cst {dimension_numbers = #tpu.dot_dimension_numbers<[1], [0], [0], [1], [0, 0, 1, 1], [], []>} : vector<8x128xbf16>, vector<128x1024xbf16>, vector<8x1024xf32> -> vector<8x1024xf32>
    %c0_3 = arith.constant 0 : index
    %c0_4 = arith.constant 0 : index
    %4 = vector.load %arg3[%c0_3, %c0_4] : memref<1x1024xf32, #tpu.memory_space<vmem>>, vector<1x1024xf32>
    %5 = vector.broadcast %4 : vector<1x1024xf32> to vector<8x1024xf32>
    %6 = arith.addf %3, %5 : vector<8x1024xf32>
    %cst_5 = arith.constant 0.000000e+00 : f32
    %7 = vector.broadcast %cst_5 : f32 to vector<8x1024xf32>
    %8 = arith.maximumf %6, %7 : vector<8x1024xf32>
    %9 = arith.truncf %8 : vector<8x1024xf32> to vector<8x1024xbf16>
    %c0_6 = arith.constant 0 : index
    %c0_7 = arith.constant 0 : index
    %10 = vector.load %arg4[%c0_6, %c0_7] : memref<1024x256xbf16, #tpu.memory_space<vmem>>, vector<1024x256xbf16>
    %cst_8 = arith.constant dense<0.000000e+00> : vector<8x256xf32>
    %11 = tpu.matmul %9, %10, %cst_8 {dimension_numbers = #tpu.dot_dimension_numbers<[1], [0], [0], [1], [0, 0, 1, 1], [], []>} : vector<8x1024xbf16>, vector<1024x256xbf16>, vector<8x256xf32> -> vector<8x256xf32>
    %c0_9 = arith.constant 0 : index
    %c0_10 = arith.constant 0 : index
    %12 = vector.load %arg5[%c0_9, %c0_10] : memref<1x256xf32, #tpu.memory_space<vmem>>, vector<1x256xf32>
    %13 = vector.broadcast %12 : vector<1x256xf32> to vector<8x256xf32>
    %14 = arith.addf %11, %13 : vector<8x256xf32>
    %cst_11 = arith.constant 0.000000e+00 : f32
    %15 = vector.broadcast %cst_11 : f32 to vector<8x256xf32>
    %16 = arith.maximumf %14, %15 : vector<8x256xf32>
    %17 = arith.truncf %16 : vector<8x256xf32> to vector<8x256xbf16>
    %c0_12 = arith.constant 0 : index
    %c0_13 = arith.constant 0 : index
    %18 = vector.load %arg6[%c0_12, %c0_13] : memref<256x128xbf16, #tpu.memory_space<vmem>>, vector<256x128xbf16>
    %cst_14 = arith.constant dense<0.000000e+00> : vector<8x128xf32>
    %19 = tpu.matmul %17, %18, %cst_14 {dimension_numbers = #tpu.dot_dimension_numbers<[1], [0], [0], [1], [0, 0, 1, 1], [], []>} : vector<8x256xbf16>, vector<256x128xbf16>, vector<8x128xf32> -> vector<8x128xf32>
    %c0_15 = arith.constant 0 : index
    %c0_16 = arith.constant 0 : index
    %20 = vector.load %arg7[%c0_15, %c0_16] : memref<1x128xf32, #tpu.memory_space<vmem>>, vector<1x128xf32>
    %21 = vector.broadcast %20 : vector<1x128xf32> to vector<8x128xf32>
    %22 = arith.addf %19, %21 : vector<8x128xf32>
    %cst_17 = arith.constant 0.000000e+00 : f32
    %23 = vector.broadcast %cst_17 : f32 to vector<8x128xf32>
    %24 = arith.subf %23, %22 : vector<8x128xf32>
    %25 = math.exp %24 : vector<8x128xf32>
    %cst_18 = arith.constant 1.000000e+00 : f32
    %26 = vector.broadcast %cst_18 : f32 to vector<8x128xf32>
    %27 = arith.addf %26, %25 : vector<8x128xf32>
    %cst_19 = arith.constant 1.000000e+00 : f32
    %28 = vector.broadcast %cst_19 : f32 to vector<8x128xf32>
    %29 = arith.divf %28, %27 : vector<8x128xf32>
    %c0_20 = arith.constant 0 : index
    %c0_21 = arith.constant 0 : index
    %30 = vector.load %arg8[%c0_20, %c0_21] : memref<8x128xf32, #tpu.memory_space<vmem>>, vector<8x128xf32>
    tpu.vector_store %arg8[%c0_20, %c0_21], %29 {strides = array<i32>} : memref<8x128xf32, #tpu.memory_space<vmem>>, vector<8x128xf32>,
    return
  }
  func.func @transform_0(%arg0: i32) -> (i32, i32) {
    %c0_i32 = arith.constant 0 : i32
    %c0_i32_0 = arith.constant 0 : i32
    return %arg0, %c0_i32 : i32, i32
  }
  func.func @transform_1(%arg0: i32) -> (i32, i32) {
    %c0_i32 = arith.constant 0 : i32
    %c0_i32_0 = arith.constant 0 : i32
    %c0_i32_1 = arith.constant 0 : i32
    return %c0_i32, %c0_i32_0 : i32, i32
  }
  func.func @transform_2(%arg0: i32) -> (i32, i32) {
    %c0_i32 = arith.constant 0 : i32
    %c0_i32_0 = arith.constant 0 : i32
    %c0_i32_1 = arith.constant 0 : i32
    return %c0_i32, %c0_i32_0 : i32, i32
  }
  func.func @transform_3(%arg0: i32) -> (i32, i32) {
    %c0_i32 = arith.constant 0 : i32
    %c0_i32_0 = arith.constant 0 : i32
    %c0_i32_1 = arith.constant 0 : i32
    return %c0_i32, %c0_i32_0 : i32, i32
  }
  func.func @transform_4(%arg0: i32) -> (i32, i32) {
    %c0_i32 = arith.constant 0 : i32
    %c0_i32_0 = arith.constant 0 : i32
    %c0_i32_1 = arith.constant 0 : i32
    return %c0_i32, %c0_i32_0 : i32, i32
  }
  func.func @transform_5(%arg0: i32) -> (i32, i32) {
    %c0_i32 = arith.constant 0 : i32
    %c0_i32_0 = arith.constant 0 : i32
    %c0_i32_1 = arith.constant 0 : i32
    return %c0_i32, %c0_i32_0 : i32, i32
  }
  func.func @transform_6(%arg0: i32) -> (i32, i32) {
    %c0_i32 = arith.constant 0 : i32
    %c0_i32_0 = arith.constant 0 : i32
    %c0_i32_1 = arith.constant 0 : i32
    return %c0_i32, %c0_i32_0 : i32, i32
  }
  func.func @transform_7(%arg0: i32) -> (i32, i32) {
    %c0_i32 = arith.constant 0 : i32
    %c0_i32_0 = arith.constant 0 : i32
    return %arg0, %c0_i32 : i32, i32
  }
}

</mosaic_0001>

<llo_original>
// kernel: prior_discriminator_pallas.1
$region0: #{prior_discriminator_pallas.1}
  #allocation0 [shape = 'u32[]', space=smem, size = 0x4, offset = 0x4, fixed_abs, tag = 'smem constant byte address 0x4 - core index']
  #allocation1 [shape = 'u32[144,128]{1,0:T(1,128)}', space=vmem, size = 0x12000, scoped, tag = 'internal scratch']
  %s0 = inlined_call_operand.vmem [shape: f32[8,128], index: 0, kind: input, shape index: {}]
  %s1 = inlined_call_operand.vmem [shape: bf16[128,1024], index: 1, kind: input, shape index: {}]
  %s2 = inlined_call_operand.vmem [shape: f32[1,1024], index: 2, kind: input, shape index: {}]
  %s3 = inlined_call_operand.vmem [shape: bf16[1024,256], index: 3, kind: input, shape index: {}]
  %s4 = inlined_call_operand.vmem [shape: f32[1,256], index: 4, kind: input, shape index: {}]
  %s5 = inlined_call_operand.vmem [shape: bf16[256,128], index: 5, kind: input, shape index: {}]
  %s6 = inlined_call_operand.vmem [shape: f32[1,128], index: 6, kind: input, shape index: {}]
  %s7 = inlined_call_operand.vmem [shape: f32[8,128], index: 7, kind: output, shape index: {}]
  %s8 = sld [smem:[#allocation0]]
  $region38: #{prior_discriminator_pallas.1} parent=0
    _
  %s10 = ssub.s32 1, %s8
  %s11 = scalar_select 0, %s10, %s8
  // Predicated region
  $region2: #{prior_discriminator_pallas.1} parent=0 // pred_check
    _
  $region3: #{prior_discriminator_pallas.1} parent=0 // pred_check_branch
    %13 = sbr.rel (0) target = $region5
  $region4: #{prior_discriminator_pallas.1} parent=0 // pred_region
    _
  $region5: #{prior_discriminator_pallas.1} parent=0 // pred_fallthru
    _
  // Predicated region
  $region6: #{prior_discriminator_pallas.1} parent=0 // pred_check
    _
  $region7: #{prior_discriminator_pallas.1} parent=0 // pred_check_branch
    %15 = sbr.rel (0) target = $region9
  $region8: #{prior_discriminator_pallas.1} parent=0 // pred_region
    _
  $region9: #{prior_discriminator_pallas.1} parent=0 // pred_fallthru
    _
  // Predicated region
  $region10: #{prior_discriminator_pallas.1} parent=0 // pred_check
    _
  $region11: #{prior_discriminator_pallas.1} parent=0 // pred_check_branch
    %17 = sbr.rel (0) target = $region13
  $region12: #{prior_discriminator_pallas.1} parent=0 // pred_region
    _
  $region13: #{prior_discriminator_pallas.1} parent=0 // pred_fallthru
    _
  // Predicated region
  $region14: #{prior_discriminator_pallas.1} parent=0 // pred_check
    _
  $region15: #{prior_discriminator_pallas.1} parent=0 // pred_check_branch
    %19 = sbr.rel (0) target = $region17
  $region16: #{prior_discriminator_pallas.1} parent=0 // pred_region
    _
  $region17: #{prior_discriminator_pallas.1} parent=0 // pred_fallthru
    _
  // Predicated region
  $region18: #{prior_discriminator_pallas.1} parent=0 // pred_check
    _
  $region19: #{prior_discriminator_pallas.1} parent=0 // pred_check_branch
    %21 = sbr.rel (0) target = $region21
  $region20: #{prior_discriminator_pallas.1} parent=0 // pred_region
    _
  $region21: #{prior_discriminator_pallas.1} parent=0 // pred_fallthru
    _
  // Predicated region
  $region22: #{prior_discriminator_pallas.1} parent=0 // pred_check
    _
  $region23: #{prior_discriminator_pallas.1} parent=0 // pred_check_branch
    %23 = sbr.rel (0) target = $region25
  $region24: #{prior_discriminator_pallas.1} parent=0 // pred_region
    _
  $region25: #{prior_discriminator_pallas.1} parent=0 // pred_fallthru
    _
  // Predicated region
  $region26: #{prior_discriminator_pallas.1} parent=0 // pred_check
    _
  $region27: #{prior_discriminator_pallas.1} parent=0 // pred_check_branch
    %25 = sbr.rel (0) target = $region29
  $region28: #{prior_discriminator_pallas.1} parent=0 // pred_region
    _
  $region29: #{prior_discriminator_pallas.1} parent=0 // pred_fallthru
    _
  %v27 = vld [vmem:[%s0] sm:$0xff]
  %v28 = vpack.c.bf16 %v27, %v27
  %v29 = vld [vmem:[%s1] sm:$0xff]
  %v30 = vld [vmem:[%s1 + $0x8] sm:$0xff]
  %v31 = vld [vmem:[%s1 + $0x10] sm:$0xff]
  %v32 = vld [vmem:[%s1 + $0x18] sm:$0xff]
  %v33 = vld [vmem:[%s1 + $0x20] sm:$0xff]
  %v34 = vld [vmem:[%s1 + $0x28] sm:$0xff]
  %v35 = vld [vmem:[%s1 + $0x30] sm:$0xff]
  %v36 = vld [vmem:[%s1 + $0x38] sm:$0xff]
  %v37 = vld [vmem:[%s1 + $0x40] sm:$0xff]
  %v38 = vld [vmem:[%s1 + $0x48] sm:$0xff]
  %v39 = vld [vmem:[%s1 + $0x50] sm:$0xff]
  %v40 = vld [vmem:[%s1 + $0x58] sm:$0xff]
  %v41 = vld [vmem:[%s1 + $0x60] sm:$0xff]
  %v42 = vld [vmem:[%s1 + $0x68] sm:$0xff]
  %v43 = vld [vmem:[%s1 + $0x70] sm:$0xff]
  %v44 = vld [vmem:[%s1 + $0x78] sm:$0xff]
  %v45 = vld [vmem:[%s1 + $0x80] sm:$0xff]
  %v46 = vld [vmem:[%s1 + $0x88] sm:$0xff]
  %v47 = vld [vmem:[%s1 + $0x90] sm:$0xff]
  %v48 = vld [vmem:[%s1 + $0x98] sm:$0xff]
  %v49 = vld [vmem:[%s1 + $0xa0] sm:$0xff]
  %v50 = vld [vmem:[%s1 + $0xa8] sm:$0xff]
  %v51 = vld [vmem:[%s1 + $0xb0] sm:$0xff]
  %v52 = vld [vmem:[%s1 + $0xb8] sm:$0xff]
  %v53 = vld [vmem:[%s1 + $0xc0] sm:$0xff]
  %v54 = vld [vmem:[%s1 + $0xc8] sm:$0xff]
  %v55 = vld [vmem:[%s1 + $0xd0] sm:$0xff]
  %v56 = vld [vmem:[%s1 + $0xd8] sm:$0xff]
  %v57 = vld [vmem:[%s1 + $0xe0] sm:$0xff]
  %v58 = vld [vmem:[%s1 + $0xe8] sm:$0xff]
  %v59 = vld [vmem:[%s1 + $0xf0] sm:$0xff]
  %v60 = vld [vmem:[%s1 + $0xf8] sm:$0xff]
  %v61 = vld [vmem:[%s1 + $0x100] sm:$0xff]
  %v62 = vld [vmem:[%s1 + $0x108] sm:$0xff]
  %v63 = vld [vmem:[%s1 + $0x110] sm:$0xff]
  %v64 = vld [vmem:[%s1 + $0x118] sm:$0xff]
  %v65 = vld [vmem:[%s1 + $0x120] sm:$0xff]
  %v66 = vld [vmem:[%s1 + $0x128] sm:$0xff]
  %v67 = vld [vmem:[%s1 + $0x130] sm:$0xff]
  %v68 = vld [vmem:[%s1 + $0x138] sm:$0xff]
  %v69 = vld [vmem:[%s1 + $0x140] sm:$0xff]
  %v70 = vld [vmem:[%s1 + $0x148] sm:$0xff]
  %v71 = vld [vmem:[%s1 + $0x150] sm:$0xff]
  %v72 = vld [vmem:[%s1 + $0x158] sm:$0xff]
  %v73 = vld [vmem:[%s1 + $0x160] sm:$0xff]
  %v74 = vld [vmem:[%s1 + $0x168] sm:$0xff]
  %v75 = vld [vmem:[%s1 + $0x170] sm:$0xff]
  %v76 = vld [vmem:[%s1 + $0x178] sm:$0xff]
  %v77 = vld [vmem:[%s1 + $0x180] sm:$0xff]
  %v78 = vld [vmem:[%s1 + $0x188] sm:$0xff]
  %v79 = vld [vmem:[%s1 + $0x190] sm:$0xff]
  %v80 = vld [vmem:[%s1 + $0x198] sm:$0xff]
  %v81 = vld [vmem:[%s1 + $0x1a0] sm:$0xff]
  %v82 = vld [vmem:[%s1 + $0x1a8] sm:$0xff]
  %v83 = vld [vmem:[%s1 + $0x1b0] sm:$0xff]
  %v84 = vld [vmem:[%s1 + $0x1b8] sm:$0xff]
  %v85 = vld [vmem:[%s1 + $0x1c0] sm:$0xff]
  %v86 = vld [vmem:[%s1 + $0x1c8] sm:$0xff]
  %v87 = vld [vmem:[%s1 + $0x1d0] sm:$0xff]
  %v88 = vld [vmem:[%s1 + $0x1d8] sm:$0xff]
  %v89 = vld [vmem:[%s1 + $0x1e0] sm:$0xff]
  %v90 = vld [vmem:[%s1 + $0x1e8] sm:$0xff]
  %v91 = vld [vmem:[%s1 + $0x1f0] sm:$0xff]
  %v92 = vld [vmem:[%s1 + $0x1f8] sm:$0xff]
  %v93 = vld [vmem:[%s2] sm:$0xff]
  %v95 = vlaneseq
  %v96 = vshrl.u32 %v95, 7
  %v97 = vsub.s32 0, %v96
  %v98 = vrot.slane %v93, %v97
  %v99 = vlaneseq
  %v100 = vshrl.u32 %v99, 7
  %v101 = vsub.s32 1, %v100
  %v102 = vrot.slane %v93, %v101
  %v103 = vlaneseq
  %v104 = vshrl.u32 %v103, 7
  %v105 = vsub.s32 2, %v104
  %v106 = vrot.slane %v93, %v105
  %v107 = vlaneseq
  %v108 = vshrl.u32 %v107, 7
  %v109 = vsub.s32 3, %v108
  %v110 = vrot.slane %v93, %v109
  %v111 = vlaneseq
  %v112 = vshrl.u32 %v111, 7
  %v113 = vsub.s32 4, %v112
  %v114 = vrot.slane %v93, %v113
  %v115 = vlaneseq
  %v116 = vshrl.u32 %v115, 7
  %v117 = vsub.s32 5, %v116
  %v118 = vrot.slane %v93, %v117
  %v119 = vlaneseq
  %v120 = vshrl.u32 %v119, 7
  %v121 = vsub.s32 6, %v120
  %v122 = vrot.slane %v93, %v121
  %v123 = vlaneseq
  %v124 = vshrl.u32 %v123, 7
  %v125 = vsub.s32 7, %v124
  %v126 = vrot.slane %v93, %v125
  %v199 = vunpack.c.l.b16 %v29
  %v200 = vunpack.c.h.b16 %v29
  %v201 = vunpack.c.l.b16 %v30
  %v202 = vunpack.c.h.b16 %v30
  %v203 = vunpack.c.l.b16 %v31
  %v204 = vunpack.c.h.b16 %v31
  %v205 = vunpack.c.l.b16 %v32
  %v206 = vunpack.c.h.b16 %v32
  %v207 = vunpack.c.l.b16 %v33
  %v208 = vunpack.c.h.b16 %v33
  %v209 = vunpack.c.l.b16 %v34
  %v210 = vunpack.c.h.b16 %v34
  %v211 = vunpack.c.l.b16 %v35
  %v212 = vunpack.c.h.b16 %v35
  %v213 = vunpack.c.l.b16 %v36
  %v214 = vunpack.c.h.b16 %v36
  %v215 = vunpack.c.l.b16 %v37
  %v216 = vunpack.c.h.b16 %v37
  %v217 = vunpack.c.l.b16 %v38
  %v218 = vunpack.c.h.b16 %v38
  %v219 = vunpack.c.l.b16 %v39
  %v220 = vunpack.c.h.b16 %v39
  %v221 = vunpack.c.l.b16 %v40
  %v222 = vunpack.c.h.b16 %v40
  %v223 = vunpack.c.l.b16 %v41
  %v224 = vunpack.c.h.b16 %v41
  %v225 = vunpack.c.l.b16 %v42
  %v226 = vunpack.c.h.b16 %v42
  %v227 = vunpack.c.l.b16 %v43
  %v228 = vunpack.c.h.b16 %v43
  %v229 = vunpack.c.l.b16 %v44
  %v230 = vunpack.c.h.b16 %v44
  %v231 = vunpack.c.l.b16 %v45
  %v232 = vunpack.c.h.b16 %v45
  %v233 = vunpack.c.l.b16 %v46
  %v234 = vunpack.c.h.b16 %v46
  %v235 = vunpack.c.l.b16 %v47
  %v236 = vunpack.c.h.b16 %v47
  %v237 = vunpack.c.l.b16 %v48
  %v238 = vunpack.c.h.b16 %v48
  %v239 = vunpack.c.l.b16 %v49
  %v240 = vunpack.c.h.b16 %v49
  %v241 = vunpack.c.l.b16 %v50
  %v242 = vunpack.c.h.b16 %v50
  %v243 = vunpack.c.l.b16 %v51
  %v244 = vunpack.c.h.b16 %v51
  %v245 = vunpack.c.l.b16 %v52
  %v246 = vunpack.c.h.b16 %v52
  %v247 = vunpack.c.l.b16 %v53
  %v248 = vunpack.c.h.b16 %v53
  %v249 = vunpack.c.l.b16 %v54
  %v250 = vunpack.c.h.b16 %v54
  %v251 = vunpack.c.l.b16 %v55
  %v252 = vunpack.c.h.b16 %v55
  %v253 = vunpack.c.l.b16 %v56
  %v254 = vunpack.c.h.b16 %v56
  %v255 = vunpack.c.l.b16 %v57
  %v256 = vunpack.c.h.b16 %v57
  %v257 = vunpack.c.l.b16 %v58
  %v258 = vunpack.c.h.b16 %v58
  %v259 = vunpack.c.l.b16 %v59
  %v260 = vunpack.c.h.b16 %v59
  %v261 = vunpack.c.l.b16 %v60
  %v262 = vunpack.c.h.b16 %v60
  %v263 = vunpack.c.l.b16 %v61
  %v264 = vunpack.c.h.b16 %v61
  %v265 = vunpack.c.l.b16 %v62
  %v266 = vunpack.c.h.b16 %v62
  %v267 = vunpack.c.l.b16 %v63
  %v268 = vunpack.c.h.b16 %v63
  %v269 = vunpack.c.l.b16 %v64
  %v270 = vunpack.c.h.b16 %v64
  %v271 = vunpack.c.l.b16 %v65
  %v272 = vunpack.c.h.b16 %v65
  %v273 = vunpack.c.l.b16 %v66
  %v274 = vunpack.c.h.b16 %v66
  %v275 = vunpack.c.l.b16 %v67
  %v276 = vunpack.c.h.b16 %v67
  %v277 = vunpack.c.l.b16 %v68
  %v278 = vunpack.c.h.b16 %v68
  %v279 = vunpack.c.l.b16 %v69
  %v280 = vunpack.c.h.b16 %v69
  %v281 = vunpack.c.l.b16 %v70
  %v282 = vunpack.c.h.b16 %v70
  %v283 = vunpack.c.l.b16 %v71
  %v284 = vunpack.c.h.b16 %v71
  %v285 = vunpack.c.l.b16 %v72
  %v286 = vunpack.c.h.b16 %v72
  %v287 = vunpack.c.l.b16 %v73
  %v288 = vunpack.c.h.b16 %v73
  %v289 = vunpack.c.l.b16 %v74
  %v290 = vunpack.c.h.b16 %v74
  %v291 = vunpack.c.l.b16 %v75
  %v292 = vunpack.c.h.b16 %v75
  %v293 = vunpack.c.l.b16 %v76
  %v294 = vunpack.c.h.b16 %v76
  %v295 = vunpack.c.l.b16 %v77
  %v296 = vunpack.c.h.b16 %v77
  %v297 = vunpack.c.l.b16 %v78
  %v298 = vunpack.c.h.b16 %v78
  %v299 = vunpack.c.l.b16 %v79
  %v300 = vunpack.c.h.b16 %v79
  %v301 = vunpack.c.l.b16 %v80
  %v302 = vunpack.c.h.b16 %v80
  %v303 = vunpack.c.l.b16 %v81
  %v304 = vunpack.c.h.b16 %v81
  %v305 = vunpack.c.l.b16 %v82
  %v306 = vunpack.c.h.b16 %v82
  %v307 = vunpack.c.l.b16 %v83
  %v308 = vunpack.c.h.b16 %v83
  %v309 = vunpack.c.l.b16 %v84
  %v310 = vunpack.c.h.b16 %v84
  %v311 = vunpack.c.l.b16 %v85
  %v312 = vunpack.c.h.b16 %v85
  %v313 = vunpack.c.l.b16 %v86
  %v314 = vunpack.c.h.b16 %v86
  %v315 = vunpack.c.l.b16 %v87
  %v316 = vunpack.c.h.b16 %v87
  %v317 = vunpack.c.l.b16 %v88
  %v318 = vunpack.c.h.b16 %v88
  %v319 = vunpack.c.l.b16 %v89
  %v320 = vunpack.c.h.b16 %v89
  %v321 = vunpack.c.l.b16 %v90
  %v322 = vunpack.c.h.b16 %v90
  %v323 = vunpack.c.l.b16 %v91
  %v324 = vunpack.c.h.b16 %v91
  %v325 = vunpack.c.l.b16 %v92
  %v326 = vunpack.c.h.b16 %v92
  %v327 = vpack.c.b16 %v207, %v199
  %v328 = vpack.c.b16 %v208, %v200
  %v329 = vpack.c.b16 %v209, %v201
  %v330 = vpack.c.b16 %v210, %v202
  %v331 = vpack.c.b16 %v211, %v203
  %v332 = vpack.c.b16 %v212, %v204
  %v333 = vpack.c.b16 %v213, %v205
  %v334 = vpack.c.b16 %v214, %v206
  %v335 = vpack.c.b16 %v223, %v215
  %v336 = vpack.c.b16 %v224, %v216
  %v337 = vpack.c.b16 %v225, %v217
  %v338 = vpack.c.b16 %v226, %v218
  %v339 = vpack.c.b16 %v227, %v219
  %v340 = vpack.c.b16 %v228, %v220
  %v341 = vpack.c.b16 %v229, %v221
  %v342 = vpack.c.b16 %v230, %v222
  %v343 = vpack.c.b16 %v239, %v231
  %v344 = vpack.c.b16 %v240, %v232
  %v345 = vpack.c.b16 %v241, %v233
  %v346 = vpack.c.b16 %v242, %v234
  %v347 = vpack.c.b16 %v243, %v235
  %v348 = vpack.c.b16 %v244, %v236
  %v349 = vpack.c.b16 %v245, %v237
  %v350 = vpack.c.b16 %v246, %v238
  %v351 = vpack.c.b16 %v255, %v247
  %v352 = vpack.c.b16 %v256, %v248
  %v353 = vpack.c.b16 %v257, %v249
  %v354 = vpack.c.b16 %v258, %v250
  %v355 = vpack.c.b16 %v259, %v251
  %v356 = vpack.c.b16 %v260, %v252
  %v357 = vpack.c.b16 %v261, %v253
  %v358 = vpack.c.b16 %v262, %v254
  %v359 = vpack.c.b16 %v271, %v263
  %v360 = vpack.c.b16 %v272, %v264
  %v361 = vpack.c.b16 %v273, %v265
  %v362 = vpack.c.b16 %v274, %v266
  %v363 = vpack.c.b16 %v275, %v267
  %v364 = vpack.c.b16 %v276, %v268
  %v365 = vpack.c.b16 %v277, %v269
  %v366 = vpack.c.b16 %v278, %v270
  %v367 = vpack.c.b16 %v287, %v279
  %v368 = vpack.c.b16 %v288, %v280
  %v369 = vpack.c.b16 %v289, %v281
  %v370 = vpack.c.b16 %v290, %v282
  %v371 = vpack.c.b16 %v291, %v283
  %v372 = vpack.c.b16 %v292, %v284
  %v373 = vpack.c.b16 %v293, %v285
  %v374 = vpack.c.b16 %v294, %v286
  %v375 = vpack.c.b16 %v303, %v295
  %v376 = vpack.c.b16 %v304, %v296
  %v377 = vpack.c.b16 %v305, %v297
  %v378 = vpack.c.b16 %v306, %v298
  %v379 = vpack.c.b16 %v307, %v299
  %v380 = vpack.c.b16 %v308, %v300
  %v381 = vpack.c.b16 %v309, %v301
  %v382 = vpack.c.b16 %v310, %v302
  %v383 = vpack.c.b16 %v319, %v311
  %v384 = vpack.c.b16 %v320, %v312
  %v385 = vpack.c.b16 %v321, %v313
  %v386 = vpack.c.b16 %v322, %v314
  %v387 = vpack.c.b16 %v323, %v315
  %v388 = vpack.c.b16 %v324, %v316
  %v389 = vpack.c.b16 %v325, %v317
  %v390 = vpack.c.b16 %v326, %v318
  %455 = vmatprep.subr.bf16.mxu0 %v328
  %456 = vmatpush1.bf16.msra.mxu0 %v327
  %457 = vmatprep.subr.bf16.mxu0 %v336
  %458 = vmatpush1.bf16.msra.mxu0 %v335
  %459 = vmatprep.subr.bf16.mxu0 %v344
  %460 = vmatpush1.bf16.msra.mxu0 %v343
  %461 = vmatprep.subr.bf16.mxu0 %v352
  %462 = vmatpush1.bf16.msra.mxu0 %v351
  %463 = vmatprep.subr.bf16.mxu0 %v360
  %464 = vmatpush1.bf16.msra.mxu0 %v359
  %465 = vmatprep.subr.bf16.mxu0 %v368
  %466 = vmatpush1.bf16.msra.mxu0 %v367
  %467 = vmatprep.subr.bf16.mxu0 %v376
  %468 = vmatpush1.bf16.msra.mxu0 %v375
  %469 = vmatprep.subr.bf16.mxu0 %v384
  %470 = vmatpush1.bf16.msra.mxu0 %v383
  %471 = vmatprep.subr.bf16.mxu0 0
  %472 = vmatpush1.bf16.msra.mxu0 0
  %473 = vmatprep.subr.bf16.mxu0 0
  %474 = vmatpush1.bf16.msra.mxu0 0
  %475 = vmatprep.subr.bf16.mxu0 0
  %476 = vmatpush1.bf16.msra.mxu0 0
  %477 = vmatprep.subr.bf16.mxu0 0
  %478 = vmatpush1.bf16.msra.mxu0 0
  %479 = vmatprep.subr.bf16.mxu0 0
  %480 = vmatpush1.bf16.msra.mxu0 0
  %481 = vmatprep.subr.bf16.mxu0 0
  %482 = vmatpush1.bf16.msra.mxu0 0
  %483 = vmatprep.subr.bf16.mxu0 0
  %484 = vmatpush1.bf16.msra.mxu0 0
  %485 = vmatprep.subr.bf16.mxu0 0
  %486 = vmatpush1.bf16.msra.mxu0 0
  %487 = vmatprep.mubr.bf16.mxu0 0
  %488 = vmatmul.mubr.bf16.gmra.mrb[0].mxu0 %v28
  %v489 = vpop.f32.mrb[0].mxu0
  %v490 = vadd.f32 %v98, %v489
  %v491 = vpop.f32.mrb[0].mxu0
  %v492 = vadd.f32 %v102, %v491
  %v493 = vpop.f32.mrb[0].mxu0
  %v494 = vpop.f32.mrb[0].mxu0
  %495 = vdwg.mxu0
  %496 = vmatprep.subr.bf16.mxu0 %v330
  %497 = vmatpush1.bf16.msra.mxu0 %v329
  %498 = vmatprep.subr.bf16.mxu0 %v338
  %499 = vmatpush1.bf16.msra.mxu0 %v337
  %500 = vmatprep.subr.bf16.mxu0 %v346
  %501 = vmatpush1.bf16.msra.mxu0 %v345
  %502 = vmatprep.subr.bf16.mxu0 %v354
  %503 = vmatpush1.bf16.msra.mxu0 %v353
  %504 = vmatprep.subr.bf16.mxu0 %v362
  %505 = vmatpush1.bf16.msra.mxu0 %v361
  %506 = vmatprep.subr.bf16.mxu0 %v370
  %507 = vmatpush1.bf16.msra.mxu0 %v369
  %508 = vmatprep.subr.bf16.mxu0 %v378
  %509 = vmatpush1.bf16.msra.mxu0 %v377
  %510 = vmatprep.subr.bf16.mxu0 %v386
  %511 = vmatpush1.bf16.msra.mxu0 %v385
  %512 = vmatprep.subr.bf16.mxu0 0
  %513 = vmatpush1.bf16.msra.mxu0 0
  %514 = vmatprep.subr.bf16.mxu0 0
  %515 = vmatpush1.bf16.msra.mxu0 0
  %516 = vmatprep.subr.bf16.mxu0 0
  %517 = vmatpush1.bf16.msra.mxu0 0
  %518 = vmatprep.subr.bf16.mxu0 0
  %519 = vmatpush1.bf16.msra.mxu0 0
  %520 = vmatprep.subr.bf16.mxu0 0
  %521 = vmatpush1.bf16.msra.mxu0 0
  %522 = vmatprep.subr.bf16.mxu0 0
  %523 = vmatpush1.bf16.msra.mxu0 0
  %524 = vmatprep.subr.bf16.mxu0 0
  %525 = vmatpush1.bf16.msra.mxu0 0
  %526 = vmatprep.subr.bf16.mxu0 0
  %527 = vmatpush1.bf16.msra.mxu0 0
  %528 = vmatprep.mubr.bf16.mxu0 0
  %529 = vmatmul.mubr.bf16.gmra.mrb[0].mxu0 %v28
  %v530 = vpop.f32.mrb[0].mxu0
  %v531 = vadd.f32 %v106, %v530
  %v532 = vpop.f32.mrb[0].mxu0
  %v533 = vadd.f32 %v110, %v532
  %v534 = vpop.f32.mrb[0].mxu0
  %v535 = vpop.f32.mrb[0].mxu0
  %536 = vdwg.mxu0
  %537 = vmatprep.subr.bf16.mxu0 %v332
  %538 = vmatpush1.bf16.msra.mxu0 %v331
  %539 = vmatprep.subr.bf16.mxu0 %v340
  %540 = vmatpush1.bf16.msra.mxu0 %v339
  %541 = vmatprep.subr.bf16.mxu0 %v348
  %542 = vmatpush1.bf16.msra.mxu0 %v347
  %543 = vmatprep.subr.bf16.mxu0 %v356
  %544 = vmatpush1.bf16.msra.mxu0 %v355
  %545 = vmatprep.subr.bf16.mxu0 %v364
  %546 = vmatpush1.bf16.msra.mxu0 %v363
  %547 = vmatprep.subr.bf16.mxu0 %v372
  %548 = vmatpush1.bf16.msra.mxu0 %v371
  %549 = vmatprep.subr.bf16.mxu0 %v380
  %550 = vmatpush1.bf16.msra.mxu0 %v379
  %551 = vmatprep.subr.bf16.mxu0 %v388
  %552 = vmatpush1.bf16.msra.mxu0 %v387
  %553 = vmatprep.subr.bf16.mxu0 0
  %554 = vmatpush1.bf16.msra.mxu0 0
  %555 = vmatprep.subr.bf16.mxu0 0
  %556 = vmatpush1.bf16.msra.mxu0 0
  %557 = vmatprep.subr.bf16.mxu0 0
  %558 = vmatpush1.bf16.msra.mxu0 0
  %559 = vmatprep.subr.bf16.mxu0 0
  %560 = vmatpush1.bf16.msra.mxu0 0
  %561 = vmatprep.subr.bf16.mxu0 0
  %562 = vmatpush1.bf16.msra.mxu0 0
  %563 = vmatprep.subr.bf16.mxu0 0
  %564 = vmatpush1.bf16.msra.mxu0 0
  %565 = vmatprep.subr.bf16.mxu0 0
  %566 = vmatpush1.bf16.msra.mxu0 0
  %567 = vmatprep.subr.bf16.mxu0 0
  %568 = vmatpush1.bf16.msra.mxu0 0
  %569 = vmatprep.mubr.bf16.mxu0 0
  %570 = vmatmul.mubr.bf16.gmra.mrb[0].mxu0 %v28
  %v571 = vpop.f32.mrb[0].mxu0
  %v572 = vadd.f32 %v114, %v571
  %v573 = vpop.f32.mrb[0].mxu0
  %v574 = vadd.f32 %v118, %v573
  %v575 = vpop.f32.mrb[0].mxu0
  %v576 = vpop.f32.mrb[0].mxu0
  %577 = vdwg.mxu0
  %578 = vmatprep.subr.bf16.mxu0 %v334
  %579 = vmatpush1.bf16.msra.mxu0 %v333
  %580 = vmatprep.subr.bf16.mxu0 %v342
  %581 = vmatpush1.bf16.msra.mxu0 %v341
  %582 = vmatprep.subr.bf16.mxu0 %v350
  %583 = vmatpush1.bf16.msra.mxu0 %v349
  %584 = vmatprep.subr.bf16.mxu0 %v358
  %585 = vmatpush1.bf16.msra.mxu0 %v357
  %586 = vmatprep.subr.bf16.mxu0 %v366
  %587 = vmatpush1.bf16.msra.mxu0 %v365
  %588 = vmatprep.subr.bf16.mxu0 %v374
  %589 = vmatpush1.bf16.msra.mxu0 %v373
  %590 = vmatprep.subr.bf16.mxu0 %v382
  %591 = vmatpush1.bf16.msra.mxu0 %v381
  %592 = vmatprep.subr.bf16.mxu0 %v390
  %593 = vmatpush1.bf16.msra.mxu0 %v389
  %594 = vmatprep.subr.bf16.mxu0 0
  %595 = vmatpush1.bf16.msra.mxu0 0
  %596 = vmatprep.subr.bf16.mxu0 0
  %597 = vmatpush1.bf16.msra.mxu0 0
  %598 = vmatprep.subr.bf16.mxu0 0
  %599 = vmatpush1.bf16.msra.mxu0 0
  %600 = vmatprep.subr.bf16.mxu0 0
  %601 = vmatpush1.bf16.msra.mxu0 0
  %602 = vmatprep.subr.bf16.mxu0 0
  %603 = vmatpush1.bf16.msra.mxu0 0
  %604 = vmatprep.subr.bf16.mxu0 0
  %605 = vmatpush1.bf16.msra.mxu0 0
  %606 = vmatprep.subr.bf16.mxu0 0
  %607 = vmatpush1.bf16.msra.mxu0 0
  %608 = vmatprep.subr.bf16.mxu0 0
  %609 = vmatpush1.bf16.msra.mxu0 0
  %610 = vmatprep.mubr.bf16.mxu0 0
  %611 = vmatmul.mubr.bf16.gmra.mrb[0].mxu0 %v28
  %v612 = vpop.f32.mrb[0].mxu0
  %v613 = vadd.f32 %v122, %v612
  %v614 = vpop.f32.mrb[0].mxu0
  %v615 = vadd.f32 %v126, %v614
  %v616 = vpop.f32.mrb[0].mxu0
  %v617 = vpop.f32.mrb[0].mxu0
  %618 = vdwg.mxu0
  %v619 = vmax.f32 %v490, 0.0
  %v620 = vmax.f32 %v492, 0.0
  %v621 = vmax.f32 %v531, 0.0
  %v622 = vmax.f32 %v533, 0.0
  %v623 = vmax.f32 %v572, 0.0
  %v624 = vmax.f32 %v574, 0.0
  %v625 = vmax.f32 %v613, 0.0
  %v626 = vmax.f32 %v615, 0.0
  %v627 = vpack.c.bf16 %v619, %v619
  %v628 = vpack.c.bf16 %v620, %v620
  %v629 = vpack.c.bf16 %v621, %v621
  %v630 = vpack.c.bf16 %v622, %v622
  %v631 = vpack.c.bf16 %v623, %v623
  %v632 = vpack.c.bf16 %v624, %v624
  %v633 = vpack.c.bf16 %v625, %v625
  %v634 = vpack.c.bf16 %v626, %v626
  %v635 = vld [vmem:[%s3] sm:$0xff]
  %v636 = vld [vmem:[%s3 + $0x8] sm:$0xff]
  %v637 = vld [vmem:[%s3 + $0x10] sm:$0xff]
  %v638 = vld [vmem:[%s3 + $0x18] sm:$0xff]
  %v639 = vld [vmem:[%s3 + $0x20] sm:$0xff]
  %v640 = vld [vmem:[%s3 + $0x28] sm:$0xff]
  %v641 = vld [vmem:[%s3 + $0x30] sm:$0xff]
  %v642 = vld [vmem:[%s3 + $0x38] sm:$0xff]
  %v643 = vld [vmem:[%s3 + $0x40] sm:$0xff]
  %v644 = vld [vmem:[%s3 + $0x48] sm:$0xff]
  %v645 = vld [vmem:[%s3 + $0x50] sm:$0xff]
  %v646 = vld [vmem:[%s3 + $0x58] sm:$0xff]
  %v647 = vld [vmem:[%s3 + $0x60] sm:$0xff]
  %v648 = vld [vmem:[%s3 + $0x68] sm:$0xff]
  %v649 = vld [vmem:[%s3 + $0x70] sm:$0xff]
  %v650 = vld [vmem:[%s3 + $0x78] sm:$0xff]
  %v651 = vld [vmem:[%s3 + $0x80] sm:$0xff]
  %v652 = vld [vmem:[%s3 + $0x88] sm:$0xff]
  %v653 = vld [vmem:[%s3 + $0x90] sm:$0xff]
  %v654 = vld [vmem:[%s3 + $0x98] sm:$0xff]
  %v655 = vld [vmem:[%s3 + $0xa0] sm:$0xff]
  %v656 = vld [vmem:[%s3 + $0xa8] sm:$0xff]
  %v657 = vld [vmem:[%s3 + $0xb0] sm:$0xff]
  %v658 = vld [vmem:[%s3 + $0xb8] sm:$0xff]
  %v659 = vld [vmem:[%s3 + $0xc0] sm:$0xff]
  %v660 = vld [vmem:[%s3 + $0xc8] sm:$0xff]
  %v661 = vld [vmem:[%s3 + $0xd0] sm:$0xff]
  %v662 = vld [vmem:[%s3 + $0xd8] sm:$0xff]
  %v663 = vld [vmem:[%s3 + $0xe0] sm:$0xff]
  %v664 = vld [vmem:[%s3 + $0xe8] sm:$0xff]
  %v665 = vld [vmem:[%s3 + $0xf0] sm:$0xff]
  %v666 = vld [vmem:[%s3 + $0xf8] sm:$0xff]
  %v667 = vld [vmem:[%s3 + $0x100] sm:$0xff]
  %v668 = vld [vmem:[%s3 + $0x108] sm:$0xff]
  %v669 = vld [vmem:[%s3 + $0x110] sm:$0xff]
  %v670 = vld [vmem:[%s3 + $0x118] sm:$0xff]
  %v671 = vld [vmem:[%s3 + $0x120] sm:$0xff]
  %v672 = vld [vmem:[%s3 + $0x128] sm:$0xff]
  %v673 = vld [vmem:[%s3 + $0x130] sm:$0xff]
  %v674 = vld [vmem:[%s3 + $0x138] sm:$0xff]
  %v675 = vld [vmem:[%s3 + $0x140] sm:$0xff]
  %v676 = vld [vmem:[%s3 + $0x148] sm:$0xff]
  %v677 = vld [vmem:[%s3 + $0x150] sm:$0xff]
  %v678 = vld [vmem:[%s3 + $0x158] sm:$0xff]
  %v679 = vld [vmem:[%s3 + $0x160] sm:$0xff]
  %v680 = vld [vmem:[%s3 + $0x168] sm:$0xff]
  %v681 = vld [vmem:[%s3 + $0x170] sm:$0xff]
  %v682 = vld [vmem:[%s3 + $0x178] sm:$0xff]
  %v683 = vld [vmem:[%s3 + $0x180] sm:$0xff]
  %v684 = vld [vmem:[%s3 + $0x188] sm:$0xff]
  %v685 = vld [vmem:[%s3 + $0x190] sm:$0xff]
  %v686 = vld [vmem:[%s3 + $0x198] sm:$0xff]
  %v687 = vld [vmem:[%s3 + $0x1a0] sm:$0xff]
  %v688 = vld [vmem:[%s3 + $0x1a8] sm:$0xff]
  %v689 = vld [vmem:[%s3 + $0x1b0] sm:$0xff]
  %v690 = vld [vmem:[%s3 + $0x1b8] sm:$0xff]
  %v691 = vld [vmem:[%s3 + $0x1c0] sm:$0xff]
  %v692 = vld [vmem:[%s3 + $0x1c8] sm:$0xff]
  %v693 = vld [vmem:[%s3 + $0x1d0] sm:$0xff]
  %v694 = vld [vmem:[%s3 + $0x1d8] sm:$0xff]
  %v695 = vld [vmem:[%s3 + $0x1e0] sm:$0xff]
  %v696 = vld [vmem:[%s3 + $0x1e8] sm:$0xff]
  %v697 = vld [vmem:[%s3 + $0x1f0] sm:$0xff]
  %v698 = vld [vmem:[%s3 + $0x1f8] sm:$0xff]
  %v699 = vld [vmem:[%s3 + $0x200] sm:$0xff]
  %v700 = vld [vmem:[%s3 + $0x208] sm:$0xff]
  %v701 = vld [vmem:[%s3 + $0x210] sm:$0xff]
  %v702 = vld [vmem:[%s3 + $0x218] sm:$0xff]
  %v703 = vld [vmem:[%s3 + $0x220] sm:$0xff]
  %v704 = vld [vmem:[%s3 + $0x228] sm:$0xff]
  %v705 = vld [vmem:[%s3 + $0x230] sm:$0xff]
  %v706 = vld [vmem:[%s3 + $0x238] sm:$0xff]
  %v707 = vld [vmem:[%s3 + $0x240] sm:$0xff]
  %v708 = vld [vmem:[%s3 + $0x248] sm:$0xff]
  %v709 = vld [vmem:[%s3 + $0x250] sm:$0xff]
  %v710 = vld [vmem:[%s3 + $0x258] sm:$0xff]
  %v711 = vld [vmem:[%s3 + $0x260] sm:$0xff]
  %v712 = vld [vmem:[%s3 + $0x268] sm:$0xff]
  %v713 = vld [vmem:[%s3 + $0x270] sm:$0xff]
  %v714 = vld [vmem:[%s3 + $0x278] sm:$0xff]
  %v715 = vld [vmem:[%s3 + $0x280] sm:$0xff]
  %v716 = vld [vmem:[%s3 + $0x288] sm:$0xff]
  %v717 = vld [vmem:[%s3 + $0x290] sm:$0xff]
  %v718 = vld [vmem:[%s3 + $0x298] sm:$0xff]
  %v719 = vld [vmem:[%s3 + $0x2a0] sm:$0xff]
  %v720 = vld [vmem:[%s3 + $0x2a8] sm:$0xff]
  %v721 = vld [vmem:[%s3 + $0x2b0] sm:$0xff]
  %v722 = vld [vmem:[%s3 + $0x2b8] sm:$0xff]
  %v723 = vld [vmem:[%s3 + $0x2c0] sm:$0xff]
  %v724 = vld [vmem:[%s3 + $0x2c8] sm:$0xff]
  %v725 = vld [vmem:[%s3 + $0x2d0] sm:$0xff]
  %v726 = vld [vmem:[%s3 + $0x2d8] sm:$0xff]
  %v727 = vld [vmem:[%s3 + $0x2e0] sm:$0xff]
  %v728 = vld [vmem:[%s3 + $0x2e8] sm:$0xff]
  %v729 = vld [vmem:[%s3 + $0x2f0] sm:$0xff]
  %v730 = vld [vmem:[%s3 + $0x2f8] sm:$0xff]
  %v731 = vld [vmem:[%s3 + $0x300] sm:$0xff]
  %v732 = vld [vmem:[%s3 + $0x308] sm:$0xff]
  %v733 = vld [vmem:[%s3 + $0x310] sm:$0xff]
  %v734 = vld [vmem:[%s3 + $0x318] sm:$0xff]
  %v735 = vld [vmem:[%s3 + $0x320] sm:$0xff]
  %v736 = vld [vmem:[%s3 + $0x328] sm:$0xff]
  %v737 = vld [vmem:[%s3 + $0x330] sm:$0xff]
  %v738 = vld [vmem:[%s3 + $0x338] sm:$0xff]
  %v739 = vld [vmem:[%s3 + $0x340] sm:$0xff]
  %v740 = vld [vmem:[%s3 + $0x348] sm:$0xff]
  %v741 = vld [vmem:[%s3 + $0x350] sm:$0xff]
  %v742 = vld [vmem:[%s3 + $0x358] sm:$0xff]
  %v743 = vld [vmem:[%s3 + $0x360] sm:$0xff]
  %v744 = vld [vmem:[%s3 + $0x368] sm:$0xff]
  %v745 = vld [vmem:[%s3 + $0x370] sm:$0xff]
  %v746 = vld [vmem:[%s3 + $0x378] sm:$0xff]
  %v747 = vld [vmem:[%s3 + $0x380] sm:$0xff]
  %v748 = vld [vmem:[%s3 + $0x388] sm:$0xff]
  %v749 = vld [vmem:[%s3 + $0x390] sm:$0xff]
  %v750 = vld [vmem:[%s3 + $0x398] sm:$0xff]
  %v751 = vld [vmem:[%s3 + $0x3a0] sm:$0xff]
  %v752 = vld [vmem:[%s3 + $0x3a8] sm:$0xff]
  %v753 = vld [vmem:[%s3 + $0x3b0] sm:$0xff]
  %v754 = vld [vmem:[%s3 + $0x3b8] sm:$0xff]
  %v755 = vld [vmem:[%s3 + $0x3c0] sm:$0xff]
  %v756 = vld [vmem:[%s3 + $0x3c8] sm:$0xff]
  %v757 = vld [vmem:[%s3 + $0x3d0] sm:$0xff]
  %v758 = vld [vmem:[%s3 + $0x3d8] sm:$0xff]
  %v759 = vld [vmem:[%s3 + $0x3e0] sm:$0xff]
  %v760 = vld [vmem:[%s3 + $0x3e8] sm:$0xff]
  %v761 = vld [vmem:[%s3 + $0x3f0] sm:$0xff]
  %v762 = vld [vmem:[%s3 + $0x3f8] sm:$0xff]
  %v763 = vld [vmem:[%s4] sm:$0x3]
  %v765 = vlaneseq
  %v766 = vshrl.u32 %v765, 7
  %v767 = vsub.s32 0, %v766
  %v768 = vrot.slane %v763, %v767
  %v769 = vlaneseq
  %v770 = vshrl.u32 %v769, 7
  %v771 = vsub.s32 1, %v770
  %v772 = vrot.slane %v763, %v771
  %v903 = vunpack.c.l.b16 %v635
  %v904 = vunpack.c.h.b16 %v635
  %v905 = vunpack.c.l.b16 %v636
  %v906 = vunpack.c.h.b16 %v636
  %v907 = vunpack.c.l.b16 %v637
  %v908 = vunpack.c.h.b16 %v637
  %v909 = vunpack.c.l.b16 %v638
  %v910 = vunpack.c.h.b16 %v638
  %v911 = vunpack.c.l.b16 %v639
  %v912 = vunpack.c.h.b16 %v639
  %v913 = vunpack.c.l.b16 %v640
  %v914 = vunpack.c.h.b16 %v640
  %v915 = vunpack.c.l.b16 %v641
  %v916 = vunpack.c.h.b16 %v641
  %v917 = vunpack.c.l.b16 %v642
  %v918 = vunpack.c.h.b16 %v642
  %v919 = vunpack.c.l.b16 %v643
  %v920 = vunpack.c.h.b16 %v643
  %v921 = vunpack.c.l.b16 %v644
  %v922 = vunpack.c.h.b16 %v644
  %v923 = vunpack.c.l.b16 %v645
  %v924 = vunpack.c.h.b16 %v645
  %v925 = vunpack.c.l.b16 %v646
  %v926 = vunpack.c.h.b16 %v646
  %v927 = vunpack.c.l.b16 %v647
  %v928 = vunpack.c.h.b16 %v647
  %v929 = vunpack.c.l.b16 %v648
  %v930 = vunpack.c.h.b16 %v648
  %v931 = vunpack.c.l.b16 %v649
  %v932 = vunpack.c.h.b16 %v649
  %v933 = vunpack.c.l.b16 %v650
  %v934 = vunpack.c.h.b16 %v650
  %v935 = vunpack.c.l.b16 %v651
  %v936 = vunpack.c.h.b16 %v651
  %v937 = vunpack.c.l.b16 %v652
  %v938 = vunpack.c.h.b16 %v652
  %v939 = vunpack.c.l.b16 %v653
  %v940 = vunpack.c.h.b16 %v653
  %v941 = vunpack.c.l.b16 %v654
  %v942 = vunpack.c.h.b16 %v654
  %v943 = vunpack.c.l.b16 %v655
  %v944 = vunpack.c.h.b16 %v655
  %v945 = vunpack.c.l.b16 %v656
  %v946 = vunpack.c.h.b16 %v656
  %v947 = vunpack.c.l.b16 %v657
  %v948 = vunpack.c.h.b16 %v657
  %v949 = vunpack.c.l.b16 %v658
  %v950 = vunpack.c.h.b16 %v658
  %v951 = vunpack.c.l.b16 %v659
  %v952 = vunpack.c.h.b16 %v659
  %v953 = vunpack.c.l.b16 %v660
  %v954 = vunpack.c.h.b16 %v660
  %v955 = vunpack.c.l.b16 %v661
  %v956 = vunpack.c.h.b16 %v661
  %v957 = vunpack.c.l.b16 %v662
  %v958 = vunpack.c.h.b16 %v662
  %v959 = vunpack.c.l.b16 %v663
  %v960 = vunpack.c.h.b16 %v663
  %v961 = vunpack.c.l.b16 %v664
  %v962 = vunpack.c.h.b16 %v664
  %v963 = vunpack.c.l.b16 %v665
  %v964 = vunpack.c.h.b16 %v665
  %v965 = vunpack.c.l.b16 %v666
  %v966 = vunpack.c.h.b16 %v666
  %v967 = vunpack.c.l.b16 %v667
  %v968 = vunpack.c.h.b16 %v667
  %v969 = vunpack.c.l.b16 %v668
  %v970 = vunpack.c.h.b16 %v668
  %v971 = vunpack.c.l.b16 %v669
  %v972 = vunpack.c.h.b16 %v669
  %v973 = vunpack.c.l.b16 %v670
  %v974 = vunpack.c.h.b16 %v670
  %v975 = vunpack.c.l.b16 %v671
  %v976 = vunpack.c.h.b16 %v671
  %v977 = vunpack.c.l.b16 %v672
  %v978 = vunpack.c.h.b16 %v672
  %v979 = vunpack.c.l.b16 %v673
  %v980 = vunpack.c.h.b16 %v673
  %v981 = vunpack.c.l.b16 %v674
  %v982 = vunpack.c.h.b16 %v674
  %v983 = vunpack.c.l.b16 %v675
  %v984 = vunpack.c.h.b16 %v675
  %v985 = vunpack.c.l.b16 %v676
  %v986 = vunpack.c.h.b16 %v676
  %v987 = vunpack.c.l.b16 %v677
  %v988 = vunpack.c.h.b16 %v677
  %v989 = vunpack.c.l.b16 %v678
  %v990 = vunpack.c.h.b16 %v678
  %v991 = vunpack.c.l.b16 %v679
  %v992 = vunpack.c.h.b16 %v679
  %v993 = vunpack.c.l.b16 %v680
  %v994 = vunpack.c.h.b16 %v680
  %v995 = vunpack.c.l.b16 %v681
  %v996 = vunpack.c.h.b16 %v681
  %v997 = vunpack.c.l.b16 %v682
  %v998 = vunpack.c.h.b16 %v682
  %v999 = vunpack.c.l.b16 %v683
  %v1000 = vunpack.c.h.b16 %v683
  %v1001 = vunpack.c.l.b16 %v684
  %v1002 = vunpack.c.h.b16 %v684
  %v1003 = vunpack.c.l.b16 %v685
  %v1004 = vunpack.c.h.b16 %v685
  %v1005 = vunpack.c.l.b16 %v686
  %v1006 = vunpack.c.h.b16 %v686
  %v1007 = vunpack.c.l.b16 %v687
  %v1008 = vunpack.c.h.b16 %v687
  %v1009 = vunpack.c.l.b16 %v688
  %v1010 = vunpack.c.h.b16 %v688
  %v1011 = vunpack.c.l.b16 %v689
  %v1012 = vunpack.c.h.b16 %v689
  %v1013 = vunpack.c.l.b16 %v690
  %v1014 = vunpack.c.h.b16 %v690
  %v1015 = vunpack.c.l.b16 %v691
  %v1016 = vunpack.c.h.b16 %v691
  %v1017 = vunpack.c.l.b16 %v692
  %v1018 = vunpack.c.h.b16 %v692
  %v1019 = vunpack.c.l.b16 %v693
  %v1020 = vunpack.c.h.b16 %v693
  %v1021 = vunpack.c.l.b16 %v694
  %v1022 = vunpack.c.h.b16 %v694
  %v1023 = vunpack.c.l.b16 %v695
  %v1024 = vunpack.c.h.b16 %v695
  %v1025 = vunpack.c.l.b16 %v696
  %v1026 = vunpack.c.h.b16 %v696
  %v1027 = vunpack.c.l.b16 %v697
  %v1028 = vunpack.c.h.b16 %v697
  %v1029 = vunpack.c.l.b16 %v698
  %v1030 = vunpack.c.h.b16 %v698
  %v1031 = vunpack.c.l.b16 %v699
  %v1032 = vunpack.c.h.b16 %v699
  %v1033 = vunpack.c.l.b16 %v700
  %v1034 = vunpack.c.h.b16 %v700
  %v1035 = vunpack.c.l.b16 %v701
  %v1036 = vunpack.c.h.b16 %v701
  %v1037 = vunpack.c.l.b16 %v702
  %v1038 = vunpack.c.h.b16 %v702
  %v1039 = vunpack.c.l.b16 %v703
  %v1040 = vunpack.c.h.b16 %v703
  %v1041 = vunpack.c.l.b16 %v704
  %v1042 = vunpack.c.h.b16 %v704
  %v1043 = vunpack.c.l.b16 %v705
  %v1044 = vunpack.c.h.b16 %v705
  %v1045 = vunpack.c.l.b16 %v706
  %v1046 = vunpack.c.h.b16 %v706
  %v1047 = vunpack.c.l.b16 %v707
  %v1048 = vunpack.c.h.b16 %v707
  %v1049 = vunpack.c.l.b16 %v708
  %v1050 = vunpack.c.h.b16 %v708
  %v1051 = vunpack.c.l.b16 %v709
  %v1052 = vunpack.c.h.b16 %v709
  %v1053 = vunpack.c.l.b16 %v710
  %v1054 = vunpack.c.h.b16 %v710
  %v1055 = vunpack.c.l.b16 %v711
  %v1056 = vunpack.c.h.b16 %v711
  %v1057 = vunpack.c.l.b16 %v712
  %v1058 = vunpack.c.h.b16 %v712
  %v1059 = vunpack.c.l.b16 %v713
  %v1060 = vunpack.c.h.b16 %v713
  %v1061 = vunpack.c.l.b16 %v714
  %v1062 = vunpack.c.h.b16 %v714
  %v1063 = vunpack.c.l.b16 %v715
  %v1064 = vunpack.c.h.b16 %v715
  %v1065 = vunpack.c.l.b16 %v716
  %v1066 = vunpack.c.h.b16 %v716
  %v1067 = vunpack.c.l.b16 %v717
  %v1068 = vunpack.c.h.b16 %v717
  %v1069 = vunpack.c.l.b16 %v718
  %v1070 = vunpack.c.h.b16 %v718
  %v1071 = vunpack.c.l.b16 %v719
  %v1072 = vunpack.c.h.b16 %v719
  %v1073 = vunpack.c.l.b16 %v720
  %v1074 = vunpack.c.h.b16 %v720
  %v1075 = vunpack.c.l.b16 %v721
  %v1076 = vunpack.c.h.b16 %v721
  %v1077 = vunpack.c.l.b16 %v722
  %v1078 = vunpack.c.h.b16 %v722
  %v1079 = vunpack.c.l.b16 %v723
  %v1080 = vunpack.c.h.b16 %v723
  %v1081 = vunpack.c.l.b16 %v724
  %v1082 = vunpack.c.h.b16 %v724
  %v1083 = vunpack.c.l.b16 %v725
  %v1084 = vunpack.c.h.b16 %v725
  %v1085 = vunpack.c.l.b16 %v726
  %v1086 = vunpack.c.h.b16 %v726
  %v1087 = vunpack.c.l.b16 %v727
  %v1088 = vunpack.c.h.b16 %v727
  %v1089 = vunpack.c.l.b16 %v728
  %v1090 = vunpack.c.h.b16 %v728
  %v1091 = vunpack.c.l.b16 %v729
  %v1092 = vunpack.c.h.b16 %v729
  %v1093 = vunpack.c.l.b16 %v730
  %v1094 = vunpack.c.h.b16 %v730
  %v1095 = vunpack.c.l.b16 %v731
  %v1096 = vunpack.c.h.b16 %v731
  %v1097 = vunpack.c.l.b16 %v732
  %v1098 = vunpack.c.h.b16 %v732
  %v1099 = vunpack.c.l.b16 %v733
  %v1100 = vunpack.c.h.b16 %v733
  %v1101 = vunpack.c.l.b16 %v734
  %v1102 = vunpack.c.h.b16 %v734
  %v1103 = vunpack.c.l.b16 %v735
  %v1104 = vunpack.c.h.b16 %v735
  %v1105 = vunpack.c.l.b16 %v736
  %v1106 = vunpack.c.h.b16 %v736
  %v1107 = vunpack.c.l.b16 %v737
  %v1108 = vunpack.c.h.b16 %v737
  %v1109 = vunpack.c.l.b16 %v738
  %v1110 = vunpack.c.h.b16 %v738
  %v1111 = vunpack.c.l.b16 %v739
  %v1112 = vunpack.c.h.b16 %v739
  %v1113 = vunpack.c.l.b16 %v740
  %v1114 = vunpack.c.h.b16 %v740
  %v1115 = vunpack.c.l.b16 %v741
  %v1116 = vunpack.c.h.b16 %v741
  %v1117 = vunpack.c.l.b16 %v742
  %v1118 = vunpack.c.h.b16 %v742
  %v1119 = vunpack.c.l.b16 %v743
  %v1120 = vunpack.c.h.b16 %v743
  %v1121 = vunpack.c.l.b16 %v744
  %v1122 = vunpack.c.h.b16 %v744
  %v1123 = vunpack.c.l.b16 %v745
  %v1124 = vunpack.c.h.b16 %v745
  %v1125 = vunpack.c.l.b16 %v746
  %v1126 = vunpack.c.h.b16 %v746
  %v1127 = vunpack.c.l.b16 %v747
  %v1128 = vunpack.c.h.b16 %v747
  %v1129 = vunpack.c.l.b16 %v748
  %v1130 = vunpack.c.h.b16 %v748
  %v1131 = vunpack.c.l.b16 %v749
  %v1132 = vunpack.c.h.b16 %v749
  %v1133 = vunpack.c.l.b16 %v750
  %v1134 = vunpack.c.h.b16 %v750
  %v1135 = vunpack.c.l.b16 %v751
  %v1136 = vunpack.c.h.b16 %v751
  %v1137 = vunpack.c.l.b16 %v752
  %v1138 = vunpack.c.h.b16 %v752
  %v1139 = vunpack.c.l.b16 %v753
  %v1140 = vunpack.c.h.b16 %v753
  %v1141 = vunpack.c.l.b16 %v754
  %v1142 = vunpack.c.h.b16 %v754
  %v1143 = vunpack.c.l.b16 %v755
  %v1144 = vunpack.c.h.b16 %v755
  %v1145 = vunpack.c.l.b16 %v756
  %v1146 = vunpack.c.h.b16 %v756
  %v1147 = vunpack.c.l.b16 %v757
  %v1148 = vunpack.c.h.b16 %v757
  %v1149 = vunpack.c.l.b16 %v758
  %v1150 = vunpack.c.h.b16 %v758
  %v1151 = vunpack.c.l.b16 %v759
  %v1152 = vunpack.c.h.b16 %v759
  %v1153 = vunpack.c.l.b16 %v760
  %v1154 = vunpack.c.h.b16 %v760
  %v1155 = vunpack.c.l.b16 %v761
  %v1156 = vunpack.c.h.b16 %v761
  %v1157 = vunpack.c.l.b16 %v762
  %v1158 = vunpack.c.h.b16 %v762
  %v1159 = vpack.c.b16 %v905, %v903
  %v1160 = vpack.c.b16 %v906, %v904
  %v1161 = vpack.c.b16 %v909, %v907
  %v1162 = vpack.c.b16 %v910, %v908
  %v1163 = vpack.c.b16 %v913, %v911
  %v1164 = vpack.c.b16 %v914, %v912
  %v1165 = vpack.c.b16 %v917, %v915
  %v1166 = vpack.c.b16 %v918, %v916
  %v1167 = vpack.c.b16 %v921, %v919
  %v1168 = vpack.c.b16 %v922, %v920
  %v1169 = vpack.c.b16 %v925, %v923
  %v1170 = vpack.c.b16 %v926, %v924
  %v1171 = vpack.c.b16 %v929, %v927
  %v1172 = vpack.c.b16 %v930, %v928
  %v1173 = vpack.c.b16 %v933, %v931
  %v1174 = vpack.c.b16 %v934, %v932
  %v1175 = vpack.c.b16 %v937, %v935
  %v1176 = vpack.c.b16 %v938, %v936
  %v1177 = vpack.c.b16 %v941, %v939
  %v1178 = vpack.c.b16 %v942, %v940
  %v1179 = vpack.c.b16 %v945, %v943
  %v1180 = vpack.c.b16 %v946, %v944
  %v1181 = vpack.c.b16 %v949, %v947
  %v1182 = vpack.c.b16 %v950, %v948
  %v1183 = vpack.c.b16 %v953, %v951
  %v1184 = vpack.c.b16 %v954, %v952
  %v1185 = vpack.c.b16 %v957, %v955
  %v1186 = vpack.c.b16 %v958, %v956
  %v1187 = vpack.c.b16 %v961, %v959
  %v1188 = vpack.c.b16 %v962, %v960
  %v1189 = vpack.c.b16 %v965, %v963
  %v1190 = vpack.c.b16 %v966, %v964
  %v1191 = vpack.c.b16 %v969, %v967
  %v1192 = vpack.c.b16 %v970, %v968
  %v1193 = vpack.c.b16 %v973, %v971
  %v1194 = vpack.c.b16 %v974, %v972
  %v1195 = vpack.c.b16 %v977, %v975
  %v1196 = vpack.c.b16 %v978, %v976
  %v1197 = vpack.c.b16 %v981, %v979
  %v1198 = vpack.c.b16 %v982, %v980
  %v1199 = vpack.c.b16 %v985, %v983
  %v1200 = vpack.c.b16 %v986, %v984
  %v1201 = vpack.c.b16 %v989, %v987
  %v1202 = vpack.c.b16 %v990, %v988
  %v1203 = vpack.c.b16 %v993, %v991
  %v1204 = vpack.c.b16 %v994, %v992
  %v1205 = vpack.c.b16 %v997, %v995
  %v1206 = vpack.c.b16 %v998, %v996
  %v1207 = vpack.c.b16 %v1001, %v999
  %v1208 = vpack.c.b16 %v1002, %v1000
  %v1209 = vpack.c.b16 %v1005, %v1003
  %v1210 = vpack.c.b16 %v1006, %v1004
  %v1211 = vpack.c.b16 %v1009, %v1007
  %v1212 = vpack.c.b16 %v1010, %v1008
  %v1213 = vpack.c.b16 %v1013, %v1011
  %v1214 = vpack.c.b16 %v1014, %v1012
  %v1215 = vpack.c.b16 %v1017, %v1015
  %v1216 = vpack.c.b16 %v1018, %v1016
  %v1217 = vpack.c.b16 %v1021, %v1019
  %v1218 = vpack.c.b16 %v1022, %v1020
  %v1219 = vpack.c.b16 %v1025, %v1023
  %v1220 = vpack.c.b16 %v1026, %v1024
  %v1221 = vpack.c.b16 %v1029, %v1027
  %v1222 = vpack.c.b16 %v1030, %v1028
  %v1223 = vpack.c.b16 %v1033, %v1031
  %v1224 = vpack.c.b16 %v1034, %v1032
  %v1225 = vpack.c.b16 %v1037, %v1035
  %v1226 = vpack.c.b16 %v1038, %v1036
  %v1227 = vpack.c.b16 %v1041, %v1039
  %v1228 = vpack.c.b16 %v1042, %v1040
  %v1229 = vpack.c.b16 %v1045, %v1043
  %v1230 = vpack.c.b16 %v1046, %v1044
  %v1231 = vpack.c.b16 %v1049, %v1047
  %v1232 = vpack.c.b16 %v1050, %v1048
  %v1233 = vpack.c.b16 %v1053, %v1051
  %v1234 = vpack.c.b16 %v1054, %v1052
  %v1235 = vpack.c.b16 %v1057, %v1055
  %v1236 = vpack.c.b16 %v1058, %v1056
  %v1237 = vpack.c.b16 %v1061, %v1059
  %v1238 = vpack.c.b16 %v1062, %v1060
  %v1239 = vpack.c.b16 %v1065, %v1063
  %v1240 = vpack.c.b16 %v1066, %v1064
  %v1241 = vpack.c.b16 %v1069, %v1067
  %v1242 = vpack.c.b16 %v1070, %v1068
  %v1243 = vpack.c.b16 %v1073, %v1071
  %v1244 = vpack.c.b16 %v1074, %v1072
  %v1245 = vpack.c.b16 %v1077, %v1075
  %v1246 = vpack.c.b16 %v1078, %v1076
  %v1247 = vpack.c.b16 %v1081, %v1079
  %v1248 = vpack.c.b16 %v1082, %v1080
  %v1249 = vpack.c.b16 %v1085, %v1083
  %v1250 = vpack.c.b16 %v1086, %v1084
  %v1251 = vpack.c.b16 %v1089, %v1087
  %v1252 = vpack.c.b16 %v1090, %v1088
  %v1253 = vpack.c.b16 %v1093, %v1091
  %v1254 = vpack.c.b16 %v1094, %v1092
  %v1255 = vpack.c.b16 %v1097, %v1095
  %v1256 = vpack.c.b16 %v1098, %v1096
  %v1257 = vpack.c.b16 %v1101, %v1099
  %v1258 = vpack.c.b16 %v1102, %v1100
  %v1259 = vpack.c.b16 %v1105, %v1103
  %v1260 = vpack.c.b16 %v1106, %v1104
  %v1261 = vpack.c.b16 %v1109, %v1107
  %v1262 = vpack.c.b16 %v1110, %v1108
  %v1263 = vpack.c.b16 %v1113, %v1111
  %v1264 = vpack.c.b16 %v1114, %v1112
  %v1265 = vpack.c.b16 %v1117, %v1115
  %v1266 = vpack.c.b16 %v1118, %v1116
  %v1267 = vpack.c.b16 %v1121, %v1119
  %v1268 = vpack.c.b16 %v1122, %v1120
  %v1269 = vpack.c.b16 %v1125, %v1123
  %v1270 = vpack.c.b16 %v1126, %v1124
  %v1271 = vpack.c.b16 %v1129, %v1127
  %v1272 = vpack.c.b16 %v1130, %v1128
  %v1273 = vpack.c.b16 %v1133, %v1131
  %v1274 = vpack.c.b16 %v1134, %v1132
  %v1275 = vpack.c.b16 %v1137, %v1135
  %v1276 = vpack.c.b16 %v1138, %v1136
  %v1277 = vpack.c.b16 %v1141, %v1139
  %v1278 = vpack.c.b16 %v1142, %v1140
  %v1279 = vpack.c.b16 %v1145, %v1143
  %v1280 = vpack.c.b16 %v1146, %v1144
  %v1281 = vpack.c.b16 %v1149, %v1147
  %v1282 = vpack.c.b16 %v1150, %v1148
  %v1283 = vpack.c.b16 %v1153, %v1151
  %v1284 = vpack.c.b16 %v1154, %v1152
  %v1285 = vpack.c.b16 %v1157, %v1155
  %v1286 = vpack.c.b16 %v1158, %v1156
  %1415 = vmatprep.subr.bf16.mxu0 %v1160
  %1416 = vmatpush1.bf16.msra.mxu0 %v1159
  %1417 = vmatprep.subr.bf16.mxu0 %v1162
  %1418 = vmatpush1.bf16.msra.mxu0 %v1161
  %1419 = vmatprep.subr.bf16.mxu0 %v1164
  %1420 = vmatpush1.bf16.msra.mxu0 %v1163
  %1421 = vmatprep.subr.bf16.mxu0 %v1166
  %1422 = vmatpush1.bf16.msra.mxu0 %v1165
  %1423 = vmatprep.subr.bf16.mxu0 %v1168
  %1424 = vmatpush1.bf16.msra.mxu0 %v1167
  %1425 = vmatprep.subr.bf16.mxu0 %v1170
  %1426 = vmatpush1.bf16.msra.mxu0 %v1169
  %1427 = vmatprep.subr.bf16.mxu0 %v1172
  %1428 = vmatpush1.bf16.msra.mxu0 %v1171
  %1429 = vmatprep.subr.bf16.mxu0 %v1174
  %1430 = vmatpush1.bf16.msra.mxu0 %v1173
  %1431 = vmatprep.subr.bf16.mxu0 %v1176
  %1432 = vmatpush1.bf16.msra.mxu0 %v1175
  %1433 = vmatprep.subr.bf16.mxu0 %v1178
  %1434 = vmatpush1.bf16.msra.mxu0 %v1177
  %1435 = vmatprep.subr.bf16.mxu0 %v1180
  %1436 = vmatpush1.bf16.msra.mxu0 %v1179
  %1437 = vmatprep.subr.bf16.mxu0 %v1182
  %1438 = vmatpush1.bf16.msra.mxu0 %v1181
  %1439 = vmatprep.subr.bf16.mxu0 %v1184
  %1440 = vmatpush1.bf16.msra.mxu0 %v1183
  %1441 = vmatprep.subr.bf16.mxu0 %v1186
  %1442 = vmatpush1.bf16.msra.mxu0 %v1185
  %1443 = vmatprep.subr.bf16.mxu0 %v1188
  %1444 = vmatpush1.bf16.msra.mxu0 %v1187
  %1445 = vmatprep.subr.bf16.mxu0 %v1190
  %1446 = vmatpush1.bf16.msra.mxu0 %v1189
  %1447 = vmatprep.mubr.bf16.mxu0 %v628
  %1448 = vmatmul.mubr.bf16.gmra.mrb[0].mxu0 %v627
  %v1449 = vpop.f32.mrb[0].mxu0
  %v1450 = vadd.f32 %v768, %v1449
  %v1451 = vpop.f32.mrb[0].mxu0
  %v1452 = vadd.f32 %v772, %v1451
  %v1453 = vpop.f32.mrb[0].mxu0
  %v1454 = vpop.f32.mrb[0].mxu0
  %1455 = vdwg.mxu0
  %1456 = vmatprep.subr.bf16.mxu0 %v1192
  %1457 = vmatpush1.bf16.msra.mxu0 %v1191
  %1458 = vmatprep.subr.bf16.mxu0 %v1194
  %1459 = vmatpush1.bf16.msra.mxu0 %v1193
  %1460 = vmatprep.subr.bf16.mxu0 %v1196
  %1461 = vmatpush1.bf16.msra.mxu0 %v1195
  %1462 = vmatprep.subr.bf16.mxu0 %v1198
  %1463 = vmatpush1.bf16.msra.mxu0 %v1197
  %1464 = vmatprep.subr.bf16.mxu0 %v1200
  %1465 = vmatpush1.bf16.msra.mxu0 %v1199
  %1466 = vmatprep.subr.bf16.mxu0 %v1202
  %1467 = vmatpush1.bf16.msra.mxu0 %v1201
  %1468 = vmatprep.subr.bf16.mxu0 %v1204
  %1469 = vmatpush1.bf16.msra.mxu0 %v1203
  %1470 = vmatprep.subr.bf16.mxu0 %v1206
  %1471 = vmatpush1.bf16.msra.mxu0 %v1205
  %1472 = vmatprep.subr.bf16.mxu0 %v1208
  %1473 = vmatpush1.bf16.msra.mxu0 %v1207
  %1474 = vmatprep.subr.bf16.mxu0 %v1210
  %1475 = vmatpush1.bf16.msra.mxu0 %v1209
  %1476 = vmatprep.subr.bf16.mxu0 %v1212
  %1477 = vmatpush1.bf16.msra.mxu0 %v1211
  %1478 = vmatprep.subr.bf16.mxu0 %v1214
  %1479 = vmatpush1.bf16.msra.mxu0 %v1213
  %1480 = vmatprep.subr.bf16.mxu0 %v1216
  %1481 = vmatpush1.bf16.msra.mxu0 %v1215
  %1482 = vmatprep.subr.bf16.mxu0 %v1218
  %1483 = vmatpush1.bf16.msra.mxu0 %v1217
  %1484 = vmatprep.subr.bf16.mxu0 %v1220
  %1485 = vmatpush1.bf16.msra.mxu0 %v1219
  %1486 = vmatprep.subr.bf16.mxu0 %v1222
  %1487 = vmatpush1.bf16.msra.mxu0 %v1221
  %1488 = vmatprep.mubr.bf16.mxu0 %v630
  %1489 = vmatmul.mubr.bf16.gmra.mrb[0].mxu0 %v629
  %v1490 = vpop.f32.mrb[0].mxu0
  %v1491 = vadd.f32 %v1450, %v1490
  %v1492 = vpop.f32.mrb[0].mxu0
  %v1493 = vadd.f32 %v1452, %v1492
  %v1494 = vpop.f32.mrb[0].mxu0
  %v1495 = vpop.f32.mrb[0].mxu0
  %1496 = vdwg.mxu0
  %1497 = vmatprep.subr.bf16.mxu0 %v1224
  %1498 = vmatpush1.bf16.msra.mxu0 %v1223
  %1499 = vmatprep.subr.bf16.mxu0 %v1226
  %1500 = vmatpush1.bf16.msra.mxu0 %v1225
  %1501 = vmatprep.subr.bf16.mxu0 %v1228
  %1502 = vmatpush1.bf16.msra.mxu0 %v1227
  %1503 = vmatprep.subr.bf16.mxu0 %v1230
  %1504 = vmatpush1.bf16.msra.mxu0 %v1229
  %1505 = vmatprep.subr.bf16.mxu0 %v1232
  %1506 = vmatpush1.bf16.msra.mxu0 %v1231
  %1507 = vmatprep.subr.bf16.mxu0 %v1234
  %1508 = vmatpush1.bf16.msra.mxu0 %v1233
  %1509 = vmatprep.subr.bf16.mxu0 %v1236
  %1510 = vmatpush1.bf16.msra.mxu0 %v1235
  %1511 = vmatprep.subr.bf16.mxu0 %v1238
  %1512 = vmatpush1.bf16.msra.mxu0 %v1237
  %1513 = vmatprep.subr.bf16.mxu0 %v1240
  %1514 = vmatpush1.bf16.msra.mxu0 %v1239
  %1515 = vmatprep.subr.bf16.mxu0 %v1242
  %1516 = vmatpush1.bf16.msra.mxu0 %v1241
  %1517 = vmatprep.subr.bf16.mxu0 %v1244
  %1518 = vmatpush1.bf16.msra.mxu0 %v1243
  %1519 = vmatprep.subr.bf16.mxu0 %v1246
  %1520 = vmatpush1.bf16.msra.mxu0 %v1245
  %1521 = vmatprep.subr.bf16.mxu0 %v1248
  %1522 = vmatpush1.bf16.msra.mxu0 %v1247
  %1523 = vmatprep.subr.bf16.mxu0 %v1250
  %1524 = vmatpush1.bf16.msra.mxu0 %v1249
  %1525 = vmatprep.subr.bf16.mxu0 %v1252
  %1526 = vmatpush1.bf16.msra.mxu0 %v1251
  %1527 = vmatprep.subr.bf16.mxu0 %v1254
  %1528 = vmatpush1.bf16.msra.mxu0 %v1253
  %1529 = vmatprep.mubr.bf16.mxu0 %v632
  %1530 = vmatmul.mubr.bf16.gmra.mrb[0].mxu0 %v631
  %v1531 = vpop.f32.mrb[0].mxu0
  %v1532 = vadd.f32 %v1491, %v1531
  %v1533 = vpop.f32.mrb[0].mxu0
  %v1534 = vadd.f32 %v1493, %v1533
  %v1535 = vpop.f32.mrb[0].mxu0
  %v1536 = vpop.f32.mrb[0].mxu0
  %1537 = vdwg.mxu0
  %1538 = vmatprep.subr.bf16.mxu0 %v1256
  %1539 = vmatpush1.bf16.msra.mxu0 %v1255
  %1540 = vmatprep.subr.bf16.mxu0 %v1258
  %1541 = vmatpush1.bf16.msra.mxu0 %v1257
  %1542 = vmatprep.subr.bf16.mxu0 %v1260
  %1543 = vmatpush1.bf16.msra.mxu0 %v1259
  %1544 = vmatprep.subr.bf16.mxu0 %v1262
  %1545 = vmatpush1.bf16.msra.mxu0 %v1261
  %1546 = vmatprep.subr.bf16.mxu0 %v1264
  %1547 = vmatpush1.bf16.msra.mxu0 %v1263
  %1548 = vmatprep.subr.bf16.mxu0 %v1266
  %1549 = vmatpush1.bf16.msra.mxu0 %v1265
  %1550 = vmatprep.subr.bf16.mxu0 %v1268
  %1551 = vmatpush1.bf16.msra.mxu0 %v1267
  %1552 = vmatprep.subr.bf16.mxu0 %v1270
  %1553 = vmatpush1.bf16.msra.mxu0 %v1269
  %1554 = vmatprep.subr.bf16.mxu0 %v1272
  %1555 = vmatpush1.bf16.msra.mxu0 %v1271
  %1556 = vmatprep.subr.bf16.mxu0 %v1274
  %1557 = vmatpush1.bf16.msra.mxu0 %v1273
  %1558 = vmatprep.subr.bf16.mxu0 %v1276
  %1559 = vmatpush1.bf16.msra.mxu0 %v1275
  %1560 = vmatprep.subr.bf16.mxu0 %v1278
  %1561 = vmatpush1.bf16.msra.mxu0 %v1277
  %1562 = vmatprep.subr.bf16.mxu0 %v1280
  %1563 = vmatpush1.bf16.msra.mxu0 %v1279
  %1564 = vmatprep.subr.bf16.mxu0 %v1282
  %1565 = vmatpush1.bf16.msra.mxu0 %v1281
  %1566 = vmatprep.subr.bf16.mxu0 %v1284
  %1567 = vmatpush1.bf16.msra.mxu0 %v1283
  %1568 = vmatprep.subr.bf16.mxu0 %v1286
  %1569 = vmatpush1.bf16.msra.mxu0 %v1285
  %1570 = vmatprep.mubr.bf16.mxu0 %v634
  %1571 = vmatmul.mubr.bf16.gmra.mrb[0].mxu0 %v633
  %v1572 = vpop.f32.mrb[0].mxu0
  %v1573 = vadd.f32 %v1532, %v1572
  %v1574 = vpop.f32.mrb[0].mxu0
  %v1575 = vadd.f32 %v1534, %v1574
  %v1576 = vpop.f32.mrb[0].mxu0
  %v1577 = vpop.f32.mrb[0].mxu0
  %1578 = vdwg.mxu0
  %v1579 = vmax.f32 %v1573, 0.0
  %v1580 = vmax.f32 %v1575, 0.0
  %v1581 = vpack.c.bf16 %v1579, %v1579
  %v1582 = vpack.c.bf16 %v1580, %v1580
  %v1583 = vld [vmem:[%s5] sm:$0xf]
  %v1584 = vld [vmem:[%s5 + $0x4] sm:$0xf]
  %v1585 = vld [vmem:[%s5 + $0x8] sm:$0xf]
  %v1586 = vld [vmem:[%s5 + $0xc] sm:$0xf]
  %v1587 = vld [vmem:[%s5 + $0x10] sm:$0xf]
  %v1588 = vld [vmem:[%s5 + $0x14] sm:$0xf]
  %v1589 = vld [vmem:[%s5 + $0x18] sm:$0xf]
  %v1590 = vld [vmem:[%s5 + $0x1c] sm:$0xf]
  %v1591 = vld [vmem:[%s5 + $0x20] sm:$0xf]
  %v1592 = vld [vmem:[%s5 + $0x24] sm:$0xf]
  %v1593 = vld [vmem:[%s5 + $0x28] sm:$0xf]
  %v1594 = vld [vmem:[%s5 + $0x2c] sm:$0xf]
  %v1595 = vld [vmem:[%s5 + $0x30] sm:$0xf]
  %v1596 = vld [vmem:[%s5 + $0x34] sm:$0xf]
  %v1597 = vld [vmem:[%s5 + $0x38] sm:$0xf]
  %v1598 = vld [vmem:[%s5 + $0x3c] sm:$0xf]
  %v1599 = vld [vmem:[%s5 + $0x40] sm:$0xf]
  %v1600 = vld [vmem:[%s5 + $0x44] sm:$0xf]
  %v1601 = vld [vmem:[%s5 + $0x48] sm:$0xf]
  %v1602 = vld [vmem:[%s5 + $0x4c] sm:$0xf]
  %v1603 = vld [vmem:[%s5 + $0x50] sm:$0xf]
  %v1604 = vld [vmem:[%s5 + $0x54] sm:$0xf]
  %v1605 = vld [vmem:[%s5 + $0x58] sm:$0xf]
  %v1606 = vld [vmem:[%s5 + $0x5c] sm:$0xf]
  %v1607 = vld [vmem:[%s5 + $0x60] sm:$0xf]
  %v1608 = vld [vmem:[%s5 + $0x64] sm:$0xf]
  %v1609 = vld [vmem:[%s5 + $0x68] sm:$0xf]
  %v1610 = vld [vmem:[%s5 + $0x6c] sm:$0xf]
  %v1611 = vld [vmem:[%s5 + $0x70] sm:$0xf]
  %v1612 = vld [vmem:[%s5 + $0x74] sm:$0xf]
  %v1613 = vld [vmem:[%s5 + $0x78] sm:$0xf]
  %v1614 = vld [vmem:[%s5 + $0x7c] sm:$0xf]
  %v1615 = vld [vmem:[%s6] sm:$0x1]
  %v1617 = vlaneseq
  %v1618 = vshrl.u32 %v1617, 7
  %v1619 = vsub.s32 0, %v1618
  %v1620 = vrot.slane %v1615, %v1619
  %v1654 = vunpack.c.l.b16 %v1583
  %v1655 = vunpack.c.l.b16 %v1584
  %v1656 = vunpack.c.l.b16 %v1585
  %v1657 = vunpack.c.l.b16 %v1586
  %v1658 = vunpack.c.l.b16 %v1587
  %v1659 = vunpack.c.l.b16 %v1588
  %v1660 = vunpack.c.l.b16 %v1589
  %v1661 = vunpack.c.l.b16 %v1590
  %v1662 = vunpack.c.l.b16 %v1591
  %v1663 = vunpack.c.l.b16 %v1592
  %v1664 = vunpack.c.l.b16 %v1593
  %v1665 = vunpack.c.l.b16 %v1594
  %v1666 = vunpack.c.l.b16 %v1595
  %v1667 = vunpack.c.l.b16 %v1596
  %v1668 = vunpack.c.l.b16 %v1597
  %v1669 = vunpack.c.l.b16 %v1598
  %v1670 = vunpack.c.l.b16 %v1599
  %v1671 = vunpack.c.l.b16 %v1600
  %v1672 = vunpack.c.l.b16 %v1601
  %v1673 = vunpack.c.l.b16 %v1602
  %v1674 = vunpack.c.l.b16 %v1603
  %v1675 = vunpack.c.l.b16 %v1604
  %v1676 = vunpack.c.l.b16 %v1605
  %v1677 = vunpack.c.l.b16 %v1606
  %v1678 = vunpack.c.l.b16 %v1607
  %v1679 = vunpack.c.l.b16 %v1608
  %v1680 = vunpack.c.l.b16 %v1609
  %v1681 = vunpack.c.l.b16 %v1610
  %v1682 = vunpack.c.l.b16 %v1611
  %v1683 = vunpack.c.l.b16 %v1612
  %v1684 = vunpack.c.l.b16 %v1613
  %v1685 = vunpack.c.l.b16 %v1614
  %v1686 = vpack.c.b16 %v1655, %v1654
  %v1687 = vpack.c.b16 %v1657, %v1656
  %v1688 = vpack.c.b16 %v1659, %v1658
  %v1689 = vpack.c.b16 %v1661, %v1660
  %v1690 = vpack.c.b16 %v1663, %v1662
  %v1691 = vpack.c.b16 %v1665, %v1664
  %v1692 = vpack.c.b16 %v1667, %v1666
  %v1693 = vpack.c.b16 %v1669, %v1668
  %v1694 = vpack.c.b16 %v1671, %v1670
  %v1695 = vpack.c.b16 %v1673, %v1672
  %v1696 = vpack.c.b16 %v1675, %v1674
  %v1697 = vpack.c.b16 %v1677, %v1676
  %v1698 = vpack.c.b16 %v1679, %v1678
  %v1699 = vpack.c.b16 %v1681, %v1680
  %v1700 = vpack.c.b16 %v1683, %v1682
  %v1701 = vpack.c.b16 %v1685, %v1684
  %1718 = vmatprep.subr.bf16.mxu0 0
  %1719 = vmatpush1.bf16.msra.mxu0 %v1686
  %1720 = vmatprep.subr.bf16.mxu0 0
  %1721 = vmatpush1.bf16.msra.mxu0 %v1687
  %1722 = vmatprep.subr.bf16.mxu0 0
  %1723 = vmatpush1.bf16.msra.mxu0 %v1688
  %1724 = vmatprep.subr.bf16.mxu0 0
  %1725 = vmatpush1.bf16.msra.mxu0 %v1689
  %1726 = vmatprep.subr.bf16.mxu0 0
  %1727 = vmatpush1.bf16.msra.mxu0 %v1690
  %1728 = vmatprep.subr.bf16.mxu0 0
  %1729 = vmatpush1.bf16.msra.mxu0 %v1691
  %1730 = vmatprep.subr.bf16.mxu0 0
  %1731 = vmatpush1.bf16.msra.mxu0 %v1692
  %1732 = vmatprep.subr.bf16.mxu0 0
  %1733 = vmatpush1.bf16.msra.mxu0 %v1693
  %1734 = vmatprep.subr.bf16.mxu0 0
  %1735 = vmatpush1.bf16.msra.mxu0 %v1694
  %1736 = vmatprep.subr.bf16.mxu0 0
  %1737 = vmatpush1.bf16.msra.mxu0 %v1695
  %1738 = vmatprep.subr.bf16.mxu0 0
  %1739 = vmatpush1.bf16.msra.mxu0 %v1696
  %1740 = vmatprep.subr.bf16.mxu0 0
  %1741 = vmatpush1.bf16.msra.mxu0 %v1697
  %1742 = vmatprep.subr.bf16.mxu0 0
  %1743 = vmatpush1.bf16.msra.mxu0 %v1698
  %1744 = vmatprep.subr.bf16.mxu0 0
  %1745 = vmatpush1.bf16.msra.mxu0 %v1699
  %1746 = vmatprep.subr.bf16.mxu0 0
  %1747 = vmatpush1.bf16.msra.mxu0 %v1700
  %1748 = vmatprep.subr.bf16.mxu0 0
  %1749 = vmatpush1.bf16.msra.mxu0 %v1701
  %1750 = vmatprep.mubr.bf16.mxu0 %v1582
  %1751 = vmatmul.mubr.bf16.gmra.mrb[0].mxu0 %v1581
  %v1752 = vpop.f32.mrb[0].mxu0
  %v1753 = vadd.f32 %v1620, %v1752
  %v1754 = vpop.f32.mrb[0].mxu0
  %v1755 = vpop.f32.mrb[0].mxu0
  %v1756 = vpop.f32.mrb[0].mxu0
  %1757 = vdwg.mxu0
  %v1758 = vsub.f32 0.0, %v1753
  %v1759 = vmul.f32 %v1758, 1.442695
  %v1760 = vpow.pop %v1759
  %v1761 = vadd.f32 %v1760, 1.0
  %v1762 = vrcp.pop %v1761
  %v1763 = vmul.f32 1.0, %v1762
  %1764 = vst [vmem:[%s7] sm:$0xff] %v1763
  // Predicated region
  $region30: #{prior_discriminator_pallas.1} parent=0 // pred_check
    _
  $region31: #{prior_discriminator_pallas.1} parent=0 // pred_check_branch
    %1766 = sbr.rel (0) target = $region33
  $region32: #{prior_discriminator_pallas.1} parent=0 // pred_region
    _
  $region33: #{prior_discriminator_pallas.1} parent=0 // pred_fallthru
    _
  // Predicated region
  $region34: #{prior_discriminator_pallas.1} parent=0 // pred_check
    _
  $region35: #{prior_discriminator_pallas.1} parent=0 // pred_check_branch
    %1768 = sbr.rel (0) target = $region37
  $region36: #{prior_discriminator_pallas.1} parent=0 // pred_region
    _
  $region37: #{prior_discriminator_pallas.1} parent=0 // pred_fallthru
    _

</llo_original>
